<compile_context>
chip_gen: v5e
topology: v5e:2x2
jax: 0.10.0
libtpu: 0.0.40
codegen_flags: <defaults>
</compile_context>

<pallas_src>
import jax
import jax.numpy as jnp
import numpy as np
from jax import lax
from jax.experimental import pallas as pl
from jax.experimental.pallas import tpu as pltpu

EPS = 1e-5


# -----------------------------------------------------------------------------
# Fused kernel (one image per grid step):
#   x:       (1, H, W, C)     input image (f32)
#   s1,b1:   (1, C)           folded bn1 scale/bias (f32)
#   w1:      (C, IC)          1x1 conv weight (bf16)
#   s2,b2:   (1, IC)          folded bn2 scale/bias (f32)
#   w2:      (9*IC, G)        3x3 conv weight, (kh, kw, ic) flattened (bf16)
#   o:       (1, H, W, C+G)   [x, conv2(relu(bn2(conv1(relu(bn1(x))))))]
# -----------------------------------------------------------------------------
def _bottleneck_kernel(x_ref, s1_ref, b1_ref, w1_ref, s2_ref, b2_ref,
                       w2_ref, o_ref):
    H, W, C = x_ref.shape[1], x_ref.shape[2], x_ref.shape[3]
    IC = w1_ref.shape[1]
    G = w2_ref.shape[1]

    x_img = x_ref[0]                                   # (H, W, C) f32
    xf = x_img.reshape(H * W, C)

    # bn1 + relu (f32 elementwise; v5e has no bf16 VPU path).
    h = jnp.maximum(xf * s1_ref[...] + b1_ref[...], 0.0)

    # 1x1 conv == channel matmul; bf16 MXU operands, f32 accumulation.
    y = jnp.dot(h.astype(jnp.bfloat16), w1_ref[...],
                preferred_element_type=jnp.float32)    # (H*W, IC)

    # bn2 + relu (f32).
    a = jnp.maximum(y * s2_ref[...] + b2_ref[...], 0.0)

    # Zero-pad H/W in VMEM (padding happens AFTER bn2+relu, matching PyTorch).
    a3 = a.reshape(H, W, IC)
    zc = jnp.zeros((H, 1, IC), jnp.float32)
    ap = jnp.concatenate([zc, a3, zc], axis=1)         # (H, W+2, IC)
    zr = jnp.zeros((1, W + 2, IC), jnp.float32)
    ap = jnp.concatenate([zr, ap, zr], axis=0)         # (H+2, W+2, IC)

    # im2col: 9 shifted views concatenated along channels -> one wide-K matmul.
    taps = [ap[dy:dy + H, dx:dx + W, :].reshape(H * W, IC)
            for dy in range(3) for dx in range(3)]
    patches = jnp.concatenate(taps, axis=-1)           # (H*W, 9*IC) f32

    conv = jnp.dot(patches.astype(jnp.bfloat16), w2_ref[...],
                   preferred_element_type=jnp.float32)  # (H*W, G)

    # Fused torch.cat((x, out), channel): write both halves in one store pass.
    o_ref[0] = jnp.concatenate(
        [x_img, conv.reshape(H, W, G)], axis=-1).astype(o_ref.dtype)


# -----------------------------------------------------------------------------
# Wrapper
# -----------------------------------------------------------------------------
def bottleneck_forward(x_nchw, params):
    """Pallas implementation of Bottleneck.forward. Input/output are NCHW."""
    N, C, H, W = x_nchw.shape

    # Fold BN params (eval mode).
    def fold_bn(p):
        scale = p["gamma"] / jnp.sqrt(p["var"] + EPS)
        bias = p["beta"] - p["mean"] * scale
        return scale.astype(jnp.float32), bias.astype(jnp.float32)

    s1, b1 = fold_bn(params["bn1"])
    s2, b2 = fold_bn(params["bn2"])

    # conv1 weight: PyTorch (IC, C, 1, 1) -> (C, IC), bf16 for the MXU.
    w1 = jnp.transpose(params["conv1_w"][:, :, 0, 0], (1, 0))
    IC = w1.shape[1]
    w1 = w1.astype(jnp.bfloat16)
    # conv2 weight: PyTorch (G, IC, 3, 3) -> (kh, kw, ic, g) -> (9*IC, G), bf16.
    w2 = jnp.transpose(params["conv2_w"], (2, 3, 1, 0)).reshape(9 * IC, -1)
    G = w2.shape[1]
    w2 = w2.astype(jnp.bfloat16)

    # NCHW -> NHWC for the kernel.
    x_nhwc = jnp.transpose(x_nchw, (0, 2, 3, 1))
    M = N * H * W

    cost = pl.CostEstimate(
        flops=2 * M * C * IC + 2 * M * 9 * IC * G,
        transcendentals=0,
        bytes_accessed=(4 * M * C + 4 * M * (C + G)
                        + 2 * (C * IC + 9 * IC * G)
                        + 4 * 2 * (C + IC)),
    )

    out_nhwc = pl.pallas_call(
        _bottleneck_kernel,
        out_shape=jax.ShapeDtypeStruct((N, H, W, C + G), jnp.float32),
        grid=(N,),
        in_specs=[
            pl.BlockSpec((1, H, W, C), lambda n: (n, 0, 0, 0)),   # x (per image)
            pl.BlockSpec((1, C), lambda n: (0, 0)),               # s1 (resident)
            pl.BlockSpec((1, C), lambda n: (0, 0)),               # b1
            pl.BlockSpec((C, IC), lambda n: (0, 0)),              # w1
            pl.BlockSpec((1, IC), lambda n: (0, 0)),              # s2
            pl.BlockSpec((1, IC), lambda n: (0, 0)),              # b2
            pl.BlockSpec((9 * IC, G), lambda n: (0, 0)),          # w2
        ],
        out_specs=pl.BlockSpec((1, H, W, C + G), lambda n: (n, 0, 0, 0)),
        compiler_params=pltpu.CompilerParams(
            dimension_semantics=("parallel",),
            vmem_limit_bytes=32 * 1024 * 1024),
        cost_estimate=cost,
    )(x_nhwc, s1.reshape(1, C), b1.reshape(1, C), w1,
      s2.reshape(1, IC), b2.reshape(1, IC), w2)

    # Back to NCHW (PyTorch convention).
    return jnp.transpose(out_nhwc, (0, 3, 1, 2))


# -----------------------------------------------------------------------------
# Pure-JAX reference (NCHW, mirrors the PyTorch module in eval mode, all f32).
# -----------------------------------------------------------------------------
def bottleneck_reference(x, params):
    def bn(h, p):
        shp = (1, -1, 1, 1)
        return ((h - p["mean"].reshape(shp)) /
                jnp.sqrt(p["var"].reshape(shp) + EPS)) * \
               p["gamma"].reshape(shp) + p["beta"].reshape(shp)

    dn = ("NCHW", "OIHW", "NCHW")
    h = jnp.maximum(bn(x, params["bn1"]), 0.0)
    h = lax.conv_general_dilated(h, params["conv1_w"], (1, 1), "VALID",
                                 dimension_numbers=dn)
    h = jnp.maximum(bn(h, params["bn2"]), 0.0)
    h = lax.conv_general_dilated(h, params["conv2_w"], (1, 1),
                                 ((1, 1), (1, 1)), dimension_numbers=dn)
    return jnp.concatenate([x, h], axis=1)


def make_params(key, nChannels, growthRate):
    interChannels = 4 * growthRate
    ks = jax.random.split(key, 10)
    f32 = jnp.float32

    def bn_params(kg, kb, km, kv, c):
        return {
            "gamma": jax.random.uniform(kg, (c,), f32, 0.5, 1.5),
            "beta": 0.1 * jax.random.normal(kb, (c,), f32),
            "mean": 0.1 * jax.random.normal(km, (c,), f32),
            "var": jax.random.uniform(kv, (c,), f32, 0.5, 1.5),
        }

    return {
        "bn1": bn_params(ks[0], ks[1], ks[2], ks[3], nChannels),
        "conv1_w": 0.1 * jax.random.normal(
            ks[4], (interChannels, nChannels, 1, 1), f32),
        "bn2": bn_params(ks[5], ks[6], ks[7], ks[8], interChannels),
        "conv2_w": 0.1 * jax.random.normal(
            ks[9], (growthRate, interChannels, 3, 3), f32),
    }


if __name__ == "__main__":
    nChannels, growthRate = 4, 4
    N, H, W = 2, 16, 16

    key = jax.random.PRNGKey(0)
    kx, kp = jax.random.split(key)
    x = jax.random.normal(kx, (N, nChannels, H, W), jnp.float32)
    params = make_params(kp, nChannels, growthRate)

    out = jax.block_until_ready(bottleneck_forward(x, params))
    ref = jax.block_until_ready(bottleneck_reference(x, params))

    assert out.shape == (N, nChannels + growthRate, H, W), out.shape
    # bf16 MXU operands (f32 accumulation) -> looser tolerance vs f32 reference.
    np.testing.assert_allclose(np.asarray(out), np.asarray(ref),
                               rtol=5e-2, atol=5e-2)
    print("KERNEL_OK")
</pallas_src>

<mosaic_0001>
module attributes {stable_mosaic.version = 11 : i64} {
  func.func @_bottleneck_kernel(%arg0: i32, %arg1: memref<1x16x16x4xf32, #tpu.memory_space<vmem>>, %arg2: memref<1x4xf32, #tpu.memory_space<vmem>>, %arg3: memref<1x4xf32, #tpu.memory_space<vmem>>, %arg4: memref<4x16xbf16, #tpu.memory_space<vmem>>, %arg5: memref<1x16xf32, #tpu.memory_space<vmem>>, %arg6: memref<1x16xf32, #tpu.memory_space<vmem>>, %arg7: memref<144x4xbf16, #tpu.memory_space<vmem>>, %arg8: memref<1x16x16x8xf32, #tpu.memory_space<vmem>>) attributes {dimension_semantics = [#tpu.dimension_semantics<parallel>], iteration_bounds = array<i64: 2>, scalar_prefetch = 0 : i64, scratch_operands = 0 : i64, tpu.core_type = #tpu.core_type<tc>, window_params = [{transform_indices = @transform_0, window_bounds = array<i64: 1, 16, 16, 4>}, {pipeline_mode = #tpu.pipeline_mode<synchronous>, transform_indices = @transform_1, window_bounds = array<i64: 1, 4>}, {pipeline_mode = #tpu.pipeline_mode<synchronous>, transform_indices = @transform_2, window_bounds = array<i64: 1, 4>}, {pipeline_mode = #tpu.pipeline_mode<synchronous>, transform_indices = @transform_3, window_bounds = array<i64: 4, 16>}, {pipeline_mode = #tpu.pipeline_mode<synchronous>, transform_indices = @transform_4, window_bounds = array<i64: 1, 16>}, {pipeline_mode = #tpu.pipeline_mode<synchronous>, transform_indices = @transform_5, window_bounds = array<i64: 1, 16>}, {pipeline_mode = #tpu.pipeline_mode<synchronous>, transform_indices = @transform_6, window_bounds = array<i64: 144, 4>}, {transform_indices = @transform_7, window_bounds = array<i64: 1, 16, 16, 8>}]} {
    %c0 = arith.constant 0 : index
    %c0_0 = arith.constant 0 : index
    %c0_1 = arith.constant 0 : index
    %c0_2 = arith.constant 0 : index
    %0 = vector.load %arg1[%c0, %c0_0, %c0_1, %c0_2] : memref<1x16x16x4xf32, #tpu.memory_space<vmem>>, vector<1x16x16x4xf32>
    %1 = vector.shape_cast %0 : vector<1x16x16x4xf32> to vector<16x16x4xf32>
    %2 = vector.shape_cast %1 : vector<16x16x4xf32> to vector<256x4xf32>
    %c0_3 = arith.constant 0 : index
    %c0_4 = arith.constant 0 : index
    %3 = vector.load %arg2[%c0_3, %c0_4] : memref<1x4xf32, #tpu.memory_space<vmem>>, vector<1x4xf32>
    %4 = vector.broadcast %3 : vector<1x4xf32> to vector<256x4xf32>
    %5 = arith.mulf %2, %4 : vector<256x4xf32>
    %c0_5 = arith.constant 0 : index
    %c0_6 = arith.constant 0 : index
    %6 = vector.load %arg3[%c0_5, %c0_6] : memref<1x4xf32, #tpu.memory_space<vmem>>, vector<1x4xf32>
    %7 = vector.broadcast %6 : vector<1x4xf32> to vector<256x4xf32>
    %8 = arith.addf %5, %7 : vector<256x4xf32>
    %cst = arith.constant 0.000000e+00 : f32
    %9 = vector.broadcast %cst : f32 to vector<256x4xf32>
    %10 = arith.maximumf %8, %9 : vector<256x4xf32>
    %11 = arith.truncf %10 : vector<256x4xf32> to vector<256x4xbf16>
    %c0_7 = arith.constant 0 : index
    %c0_8 = arith.constant 0 : index
    %12 = vector.load %arg4[%c0_7, %c0_8] : memref<4x16xbf16, #tpu.memory_space<vmem>>, vector<4x16xbf16>
    %cst_9 = arith.constant dense<0.000000e+00> : vector<256x16xf32>
    %13 = tpu.matmul %11, %12, %cst_9 {dimension_numbers = #tpu.dot_dimension_numbers<[1], [0], [0], [1], [0, 0, 1, 1], [], []>} : vector<256x4xbf16>, vector<4x16xbf16>, vector<256x16xf32> -> vector<256x16xf32>
    %c0_10 = arith.constant 0 : index
    %c0_11 = arith.constant 0 : index
    %14 = vector.load %arg5[%c0_10, %c0_11] : memref<1x16xf32, #tpu.memory_space<vmem>>, vector<1x16xf32>
    %15 = vector.broadcast %14 : vector<1x16xf32> to vector<256x16xf32>
    %16 = arith.mulf %13, %15 : vector<256x16xf32>
    %c0_12 = arith.constant 0 : index
    %c0_13 = arith.constant 0 : index
    %17 = vector.load %arg6[%c0_12, %c0_13] : memref<1x16xf32, #tpu.memory_space<vmem>>, vector<1x16xf32>
    %18 = vector.broadcast %17 : vector<1x16xf32> to vector<256x16xf32>
    %19 = arith.addf %16, %18 : vector<256x16xf32>
    %cst_14 = arith.constant 0.000000e+00 : f32
    %20 = vector.broadcast %cst_14 : f32 to vector<256x16xf32>
    %21 = arith.maximumf %19, %20 : vector<256x16xf32>
    %22 = vector.shape_cast %21 : vector<256x16xf32> to vector<16x16x16xf32>
    %cst_15 = arith.constant 0.000000e+00 : f32
    %23 = vector.broadcast %cst_15 : f32 to vector<16x1x16xf32>
    %24 = tpu.concatenate %23, %22, %23 in 1 : vector<16x1x16xf32>, vector<16x16x16xf32>, vector<16x1x16xf32> -> vector<16x18x16xf32>
    %cst_16 = arith.constant 0.000000e+00 : f32
    %25 = vector.broadcast %cst_16 : f32 to vector<1x18x16xf32>
    %26 = tpu.concatenate %25, %24, %25 in 0 : vector<1x18x16xf32>, vector<16x18x16xf32>, vector<1x18x16xf32> -> vector<18x18x16xf32>
    %27 = vector.extract_strided_slice %26 {offsets = [0, 0, 0], sizes = [16, 16, 16], strides = [1, 1, 1]} : vector<18x18x16xf32> to vector<16x16x16xf32>
    %28 = vector.shape_cast %27 : vector<16x16x16xf32> to vector<256x16xf32>
    %29 = vector.extract_strided_slice %26 {offsets = [0, 1, 0], sizes = [16, 16, 16], strides = [1, 1, 1]} : vector<18x18x16xf32> to vector<16x16x16xf32>
    %30 = vector.shape_cast %29 : vector<16x16x16xf32> to vector<256x16xf32>
    %31 = vector.extract_strided_slice %26 {offsets = [0, 2, 0], sizes = [16, 16, 16], strides = [1, 1, 1]} : vector<18x18x16xf32> to vector<16x16x16xf32>
    %32 = vector.shape_cast %31 : vector<16x16x16xf32> to vector<256x16xf32>
    %33 = vector.extract_strided_slice %26 {offsets = [1, 0, 0], sizes = [16, 16, 16], strides = [1, 1, 1]} : vector<18x18x16xf32> to vector<16x16x16xf32>
    %34 = vector.shape_cast %33 : vector<16x16x16xf32> to vector<256x16xf32>
    %35 = vector.extract_strided_slice %26 {offsets = [1, 1, 0], sizes = [16, 16, 16], strides = [1, 1, 1]} : vector<18x18x16xf32> to vector<16x16x16xf32>
    %36 = vector.shape_cast %35 : vector<16x16x16xf32> to vector<256x16xf32>
    %37 = vector.extract_strided_slice %26 {offsets = [1, 2, 0], sizes = [16, 16, 16], strides = [1, 1, 1]} : vector<18x18x16xf32> to vector<16x16x16xf32>
    %38 = vector.shape_cast %37 : vector<16x16x16xf32> to vector<256x16xf32>
    %39 = vector.extract_strided_slice %26 {offsets = [2, 0, 0], sizes = [16, 16, 16], strides = [1, 1, 1]} : vector<18x18x16xf32> to vector<16x16x16xf32>
    %40 = vector.shape_cast %39 : vector<16x16x16xf32> to vector<256x16xf32>
    %41 = vector.extract_strided_slice %26 {offsets = [2, 1, 0], sizes = [16, 16, 16], strides = [1, 1, 1]} : vector<18x18x16xf32> to vector<16x16x16xf32>
    %42 = vector.shape_cast %41 : vector<16x16x16xf32> to vector<256x16xf32>
    %43 = vector.extract_strided_slice %26 {offsets = [2, 2, 0], sizes = [16, 16, 16], strides = [1, 1, 1]} : vector<18x18x16xf32> to vector<16x16x16xf32>
    %44 = vector.shape_cast %43 : vector<16x16x16xf32> to vector<256x16xf32>
    %45 = tpu.concatenate %28, %30, %32, %34, %36, %38, %40, %42, %44 in 1 : vector<256x16xf32>, vector<256x16xf32>, vector<256x16xf32>, vector<256x16xf32>, vector<256x16xf32>, vector<256x16xf32>, vector<256x16xf32>, vector<256x16xf32>, vector<256x16xf32> -> vector<256x144xf32>
    %46 = arith.truncf %45 : vector<256x144xf32> to vector<256x144xbf16>
    %c0_17 = arith.constant 0 : index
    %c0_18 = arith.constant 0 : index
    %47 = vector.load %arg7[%c0_17, %c0_18] : memref<144x4xbf16, #tpu.memory_space<vmem>>, vector<144x4xbf16>
    %cst_19 = arith.constant dense<0.000000e+00> : vector<256x4xf32>
    %48 = tpu.matmul %46, %47, %cst_19 {dimension_numbers = #tpu.dot_dimension_numbers<[1], [0], [0], [1], [0, 0, 1, 1], [], []>} : vector<256x144xbf16>, vector<144x4xbf16>, vector<256x4xf32> -> vector<256x4xf32>
    %49 = vector.shape_cast %48 : vector<256x4xf32> to vector<16x16x4xf32>
    %50 = tpu.concatenate %1, %49 in 2 : vector<16x16x4xf32>, vector<16x16x4xf32> -> vector<16x16x8xf32>
    %c0_20 = arith.constant 0 : index
    %c0_21 = arith.constant 0 : index
    %c0_22 = arith.constant 0 : index
    %c0_23 = arith.constant 0 : index
    %51 = vector.load %arg8[%c0_20, %c0_21, %c0_22, %c0_23] : memref<1x16x16x8xf32, #tpu.memory_space<vmem>>, vector<1x16x16x8xf32>
    %52 = vector.shape_cast %51 : vector<1x16x16x8xf32> to vector<16x16x8xf32>
    %53 = vector.shape_cast %50 : vector<16x16x8xf32> to vector<1x16x16x8xf32>
    tpu.vector_store %arg8[%c0_20, %c0_21, %c0_22, %c0_23], %53 {strides = array<i32>} : memref<1x16x16x8xf32, #tpu.memory_space<vmem>>, vector<1x16x16x8xf32>,
    return
  }
  func.func @transform_0(%arg0: i32) -> (i32, i32, i32, i32) {
    %c0_i32 = arith.constant 0 : i32
    %c0_i32_0 = arith.constant 0 : i32
    %c0_i32_1 = arith.constant 0 : i32
    %c0_i32_2 = arith.constant 0 : i32
    return %arg0, %c0_i32, %c0_i32_0, %c0_i32_1 : i32, i32, i32, i32
  }
  func.func @transform_1(%arg0: i32) -> (i32, i32) {
    %c0_i32 = arith.constant 0 : i32
    %c0_i32_0 = arith.constant 0 : i32
    %c0_i32_1 = arith.constant 0 : i32
    return %c0_i32, %c0_i32_0 : i32, i32
  }
  func.func @transform_2(%arg0: i32) -> (i32, i32) {
    %c0_i32 = arith.constant 0 : i32
    %c0_i32_0 = arith.constant 0 : i32
    %c0_i32_1 = arith.constant 0 : i32
    return %c0_i32, %c0_i32_0 : i32, i32
  }
  func.func @transform_3(%arg0: i32) -> (i32, i32) {
    %c0_i32 = arith.constant 0 : i32
    %c0_i32_0 = arith.constant 0 : i32
    %c0_i32_1 = arith.constant 0 : i32
    return %c0_i32, %c0_i32_0 : i32, i32
  }
  func.func @transform_4(%arg0: i32) -> (i32, i32) {
    %c0_i32 = arith.constant 0 : i32
    %c0_i32_0 = arith.constant 0 : i32
    %c0_i32_1 = arith.constant 0 : i32
    return %c0_i32, %c0_i32_0 : i32, i32
  }
  func.func @transform_5(%arg0: i32) -> (i32, i32) {
    %c0_i32 = arith.constant 0 : i32
    %c0_i32_0 = arith.constant 0 : i32
    %c0_i32_1 = arith.constant 0 : i32
    return %c0_i32, %c0_i32_0 : i32, i32
  }
  func.func @transform_6(%arg0: i32) -> (i32, i32) {
    %c0_i32 = arith.constant 0 : i32
    %c0_i32_0 = arith.constant 0 : i32
    %c0_i32_1 = arith.constant 0 : i32
    return %c0_i32, %c0_i32_0 : i32, i32
  }
  func.func @transform_7(%arg0: i32) -> (i32, i32, i32, i32) {
    %c0_i32 = arith.constant 0 : i32
    %c0_i32_0 = arith.constant 0 : i32
    %c0_i32_1 = arith.constant 0 : i32
    %c0_i32_2 = arith.constant 0 : i32
    return %arg0, %c0_i32, %c0_i32_0, %c0_i32_1 : i32, i32, i32, i32
  }
}

</mosaic_0001>

<llo_original>
// kernel: tpu_custom_call.1
$region0: #{tpu_custom_call.1}
  #allocation0 [shape = 'u32[]', space=smem, size = 0x4, offset = 0x4, fixed_abs, tag = 'smem constant byte address 0x4 - core index']
  #allocation1 [shape = 'u32[72,128]{1,0:T(1,128)}', space=vmem, size = 0x9000, scoped, tag = 'internal scratch']
  %s0 = inlined_call_operand.vmem [shape: f32[2,16,16,4], index: 0, kind: input, shape index: {}]
  %s1 = inlined_call_operand.vmem [shape: f32[1,4], index: 1, kind: input, shape index: {}]
  %s2 = inlined_call_operand.vmem [shape: f32[1,4], index: 2, kind: input, shape index: {}]
  %s3 = inlined_call_operand.vmem [shape: bf16[4,16], index: 3, kind: input, shape index: {}]
  %s4 = inlined_call_operand.vmem [shape: f32[1,16], index: 4, kind: input, shape index: {}]
  %s5 = inlined_call_operand.vmem [shape: f32[1,16], index: 5, kind: input, shape index: {}]
  %s6 = inlined_call_operand.vmem [shape: bf16[144,4], index: 6, kind: input, shape index: {}]
  %s7 = inlined_call_operand.vmem [shape: f32[2,16,16,8], index: 7, kind: output, shape index: {}]
  %s8 = sld [smem:[#allocation0]]
  $region61: #{tpu_custom_call.1} parent=0
    _
  %s10 = ssub.s32 1, %s8
  %s11 = scalar_select 0, %s10, %s8
  loop: start=0, step=1, limit=4
  $region2: #{tpu_custom_call.1} parent=0 // loop_pre_header
    _
  $region3: #{tpu_custom_call.1} parent=0 // loop_header
    %s13 = sphi 0, %s17
    %p14 = scmp.ge.s32.totalorder %s13, 4
    %s23 = sphi 0, %s25
    %s26 = sphi 0, %s23
    %s27 = sphi 0, %s26
    %s43 = sphi 0, %s27
    %s47 = sphi 0, %s47
    %s49 = sphi 0, %s47
    %s50 = sphi 0, %s49
    %s64 = sphi 0, %s50
    %s68 = sphi 0, %s68
    %s70 = sphi 0, %s68
    %s71 = sphi 0, %s70
    %s85 = sphi 0, %s71
    %s89 = sphi 0, %s89
    %s91 = sphi 0, %s89
    %s92 = sphi 0, %s91
    %s106 = sphi 0, %s92
    %s110 = sphi 0, %s110
    %s112 = sphi 0, %s110
    %s113 = sphi 0, %s112
    %s127 = sphi 0, %s113
    %s131 = sphi 0, %s131
    %s133 = sphi 0, %s131
    %s134 = sphi 0, %s133
    %s148 = sphi 0, %s134
    %s152 = sphi 0, %s152
    %s154 = sphi 0, %s152
    %s155 = sphi 0, %s154
    %s169 = sphi 0, %s155
    %s175 = sphi 0, %s177
    %s178 = sphi 0, %s175
    %s179 = sphi 0, %s178
    %s195 = sphi 0, %s179
  $region4: #{tpu_custom_call.1} parent=0 // loop_header_branch
    %16 = sbr.rel (%p14) target = $region8
  $region5: #{tpu_custom_call.1} parent=0 // loop_body
    %s18 = ssub.s32 %s13, 1
    %s19 = ssub.s32 %s13, 2
    %s20 = sadd.s32 %s13, 1
    %s21 = ssub.s32 %s13, %s20
    %p22 = scmp.eq.s32.totalorder %s21, 0
    %s24 = sadd.s32 %s23, 1
    %s25 = scalar_select %p22, %s23, %s24
    %p28 = pneg %p22
    %p29 = scmp.eq.s32.totalorder %s13, 1
    %p30 = por %p28, %p29
    %p31 = scmp.ne.s32.totalorder %s23, %s26
    %p32 = scmp.eq.s32.totalorder %s13, 0
    %p33 = por %p31, %p32
    %p34 = scmp.ne.s32.totalorder %s23, %s26
    %p35 = scmp.eq.s32.totalorder %s18, 1
    %p36 = por %p34, %p35
    %p37 = scmp.ne.s32.totalorder %s26, %s27
    %p38 = scmp.eq.s32.totalorder %s18, 0
    %p39 = por %p37, %p38
    %p40 = scmp.ne.s32.totalorder %s26, %s27
    %p41 = scmp.eq.s32.totalorder %s19, 1
    %p42 = por %p40, %p41
    %p44 = scmp.ne.s32.totalorder %s27, %s43
    %p45 = scmp.eq.s32.totalorder %s19, 0
    %p46 = por %p44, %p45
    %s48 = sadd.s32 %s47, 1
    %p51 = scmp.eq.s32.totalorder %s13, 1
    %p52 = scmp.ne.s32.totalorder %s47, %s49
    %p53 = scmp.eq.s32.totalorder %s13, 0
    %p54 = por %p52, %p53
    %p55 = scmp.ne.s32.totalorder %s47, %s49
    %p56 = scmp.eq.s32.totalorder %s18, 1
    %p57 = por %p55, %p56
    %p58 = scmp.ne.s32.totalorder %s49, %s50
    %p59 = scmp.eq.s32.totalorder %s18, 0
    %p60 = por %p58, %p59
    %p61 = scmp.ne.s32.totalorder %s49, %s50
    %p62 = scmp.eq.s32.totalorder %s19, 1
    %p63 = por %p61, %p62
    %p65 = scmp.ne.s32.totalorder %s50, %s64
    %p66 = scmp.eq.s32.totalorder %s19, 0
    %p67 = por %p65, %p66
    %s69 = sadd.s32 %s68, 1
    %p72 = scmp.eq.s32.totalorder %s13, 1
    %p73 = scmp.ne.s32.totalorder %s68, %s70
    %p74 = scmp.eq.s32.totalorder %s13, 0
    %p75 = por %p73, %p74
    %p76 = scmp.ne.s32.totalorder %s68, %s70
    %p77 = scmp.eq.s32.totalorder %s18, 1
    %p78 = por %p76, %p77
    %p79 = scmp.ne.s32.totalorder %s70, %s71
    %p80 = scmp.eq.s32.totalorder %s18, 0
    %p81 = por %p79, %p80
    %p82 = scmp.ne.s32.totalorder %s70, %s71
    %p83 = scmp.eq.s32.totalorder %s19, 1
    %p84 = por %p82, %p83
    %p86 = scmp.ne.s32.totalorder %s71, %s85
    %p87 = scmp.eq.s32.totalorder %s19, 0
    %p88 = por %p86, %p87
    %s90 = sadd.s32 %s89, 1
    %p93 = scmp.eq.s32.totalorder %s13, 1
    %p94 = scmp.ne.s32.totalorder %s89, %s91
    %p95 = scmp.eq.s32.totalorder %s13, 0
    %p96 = por %p94, %p95
    %p97 = scmp.ne.s32.totalorder %s89, %s91
    %p98 = scmp.eq.s32.totalorder %s18, 1
    %p99 = por %p97, %p98
    %p100 = scmp.ne.s32.totalorder %s91, %s92
    %p101 = scmp.eq.s32.totalorder %s18, 0
    %p102 = por %p100, %p101
    %p103 = scmp.ne.s32.totalorder %s91, %s92
    %p104 = scmp.eq.s32.totalorder %s19, 1
    %p105 = por %p103, %p104
    %p107 = scmp.ne.s32.totalorder %s92, %s106
    %p108 = scmp.eq.s32.totalorder %s19, 0
    %p109 = por %p107, %p108
    %s111 = sadd.s32 %s110, 1
    %p114 = scmp.eq.s32.totalorder %s13, 1
    %p115 = scmp.ne.s32.totalorder %s110, %s112
    %p116 = scmp.eq.s32.totalorder %s13, 0
    %p117 = por %p115, %p116
    %p118 = scmp.ne.s32.totalorder %s110, %s112
    %p119 = scmp.eq.s32.totalorder %s18, 1
    %p120 = por %p118, %p119
    %p121 = scmp.ne.s32.totalorder %s112, %s113
    %p122 = scmp.eq.s32.totalorder %s18, 0
    %p123 = por %p121, %p122
    %p124 = scmp.ne.s32.totalorder %s112, %s113
    %p125 = scmp.eq.s32.totalorder %s19, 1
    %p126 = por %p124, %p125
    %p128 = scmp.ne.s32.totalorder %s113, %s127
    %p129 = scmp.eq.s32.totalorder %s19, 0
    %p130 = por %p128, %p129
    %s132 = sadd.s32 %s131, 1
    %p135 = scmp.eq.s32.totalorder %s13, 1
    %p136 = scmp.ne.s32.totalorder %s131, %s133
    %p137 = scmp.eq.s32.totalorder %s13, 0
    %p138 = por %p136, %p137
    %p139 = scmp.ne.s32.totalorder %s131, %s133
    %p140 = scmp.eq.s32.totalorder %s18, 1
    %p141 = por %p139, %p140
    %p142 = scmp.ne.s32.totalorder %s133, %s134
    %p143 = scmp.eq.s32.totalorder %s18, 0
    %p144 = por %p142, %p143
    %p145 = scmp.ne.s32.totalorder %s133, %s134
    %p146 = scmp.eq.s32.totalorder %s19, 1
    %p147 = por %p145, %p146
    %p149 = scmp.ne.s32.totalorder %s134, %s148
    %p150 = scmp.eq.s32.totalorder %s19, 0
    %p151 = por %p149, %p150
    %s153 = sadd.s32 %s152, 1
    %p156 = scmp.eq.s32.totalorder %s13, 1
    %p157 = scmp.ne.s32.totalorder %s152, %s154
    %p158 = scmp.eq.s32.totalorder %s13, 0
    %p159 = por %p157, %p158
    %p160 = scmp.ne.s32.totalorder %s152, %s154
    %p161 = scmp.eq.s32.totalorder %s18, 1
    %p162 = por %p160, %p161
    %p163 = scmp.ne.s32.totalorder %s154, %s155
    %p164 = scmp.eq.s32.totalorder %s18, 0
    %p165 = por %p163, %p164
    %p166 = scmp.ne.s32.totalorder %s154, %s155
    %p167 = scmp.eq.s32.totalorder %s19, 1
    %p168 = por %p166, %p167
    %p170 = scmp.ne.s32.totalorder %s155, %s169
    %p171 = scmp.eq.s32.totalorder %s19, 0
    %p172 = por %p170, %p171
    %s173 = ssub.s32 %s13, %s20
    %p174 = scmp.eq.s32.totalorder %s173, 0
    %s176 = sadd.s32 %s175, 1
    %s177 = scalar_select %p174, %s175, %s176
    %p180 = pneg %p174
    %p181 = scmp.eq.s32.totalorder %s13, 1
    %p182 = por %p180, %p181
    %p183 = scmp.ne.s32.totalorder %s175, %s178
    %p184 = scmp.eq.s32.totalorder %s13, 0
    %p185 = por %p183, %p184
    %p186 = scmp.ne.s32.totalorder %s175, %s178
    %p187 = scmp.eq.s32.totalorder %s18, 1
    %p188 = por %p186, %p187
    %p189 = scmp.ne.s32.totalorder %s178, %s179
    %p190 = scmp.eq.s32.totalorder %s18, 0
    %p191 = por %p189, %p190
    %p192 = scmp.ne.s32.totalorder %s178, %s179
    %p193 = scmp.eq.s32.totalorder %s19, 1
    %p194 = por %p192, %p193
    %p196 = scmp.ne.s32.totalorder %s179, %s195
    %p197 = scmp.eq.s32.totalorder %s19, 0
    %p198 = por %p196, %p197
    %p199 = scmp.le.s32.totalorder 1, %s13
    %p200 = scmp.lt.s32.totalorder %s13, 3
    %p201 = pnand %p199, %p200
    %p202 = pneg %p201
    // Predicated region
    $region9: #{tpu_custom_call.1} parent=5 // pred_check
      _
    $region10: #{tpu_custom_call.1} parent=5 // pred_check_branch
      %204 = sbr.rel (%p201) target = $region12
    $region11: #{tpu_custom_call.1} parent=5 // pred_region
      %s205 = ssub.s32 %s13, 1
      // Predicated region
      $region13: #{tpu_custom_call.1} parent=11 // pred_check
        %p206 = pneg %p60
      $region14: #{tpu_custom_call.1} parent=11 // pred_check_branch
        %208 = sbr.rel (%p206) target = $region16
      $region15: #{tpu_custom_call.1} parent=11 // pred_region
        _
      $region16: #{tpu_custom_call.1} parent=11 // pred_fallthru
        _
      // Predicated region
      $region17: #{tpu_custom_call.1} parent=11 // pred_check
        %p209 = pneg %p81
      $region18: #{tpu_custom_call.1} parent=11 // pred_check_branch
        %211 = sbr.rel (%p209) target = $region20
      $region19: #{tpu_custom_call.1} parent=11 // pred_region
        _
      $region20: #{tpu_custom_call.1} parent=11 // pred_fallthru
        _
      // Predicated region
      $region21: #{tpu_custom_call.1} parent=11 // pred_check
        %p212 = pneg %p102
      $region22: #{tpu_custom_call.1} parent=11 // pred_check_branch
        %214 = sbr.rel (%p212) target = $region24
      $region23: #{tpu_custom_call.1} parent=11 // pred_region
        _
      $region24: #{tpu_custom_call.1} parent=11 // pred_fallthru
        _
      // Predicated region
      $region25: #{tpu_custom_call.1} parent=11 // pred_check
        %p215 = pneg %p123
      $region26: #{tpu_custom_call.1} parent=11 // pred_check_branch
        %217 = sbr.rel (%p215) target = $region28
      $region27: #{tpu_custom_call.1} parent=11 // pred_region
        _
      $region28: #{tpu_custom_call.1} parent=11 // pred_fallthru
        _
      // Predicated region
      $region29: #{tpu_custom_call.1} parent=11 // pred_check
        %p218 = pneg %p144
      $region30: #{tpu_custom_call.1} parent=11 // pred_check_branch
        %220 = sbr.rel (%p218) target = $region32
      $region31: #{tpu_custom_call.1} parent=11 // pred_region
        _
      $region32: #{tpu_custom_call.1} parent=11 // pred_fallthru
        _
      // Predicated region
      $region33: #{tpu_custom_call.1} parent=11 // pred_check
        %p221 = pneg %p165
      $region34: #{tpu_custom_call.1} parent=11 // pred_check_branch
        %223 = sbr.rel (%p221) target = $region36
      $region35: #{tpu_custom_call.1} parent=11 // pred_region
        _
      $region36: #{tpu_custom_call.1} parent=11 // pred_fallthru
        _
    $region12: #{tpu_custom_call.1} parent=5 // pred_fallthru
      _
    %p224 = scmp.lt.s32.totalorder %s13, 2
    // Predicated region
    $region37: #{tpu_custom_call.1} parent=5 // pred_check
      %p225 = pneg %p224
    $region38: #{tpu_custom_call.1} parent=5 // pred_check_branch
      %227 = sbr.rel (%p225) target = $region40
    $region39: #{tpu_custom_call.1} parent=5 // pred_region
      // Predicated region
      $region41: #{tpu_custom_call.1} parent=39 // pred_check
        %p228 = pneg %p33
      $region42: #{tpu_custom_call.1} parent=39 // pred_check_branch
        %230 = sbr.rel (%p228) target = $region44
      $region43: #{tpu_custom_call.1} parent=39 // pred_region
        %p231 = scmp.lt.s32.totalorder %s13, 1
        %s232 = scalar_select %p231, %s13, 1
        %s233 = smul.addr %s232, 32
        %s234 = smul.addr %s233, 8
        %s235 = scalar_lea.vmem %s0, %s234
      $region44: #{tpu_custom_call.1} parent=39 // pred_fallthru
        _
    $region40: #{tpu_custom_call.1} parent=5 // pred_fallthru
      _
    %p236 = scmp.le.s32.totalorder 1, %s13
    %p237 = scmp.lt.s32.totalorder %s13, 3
    %p238 = pnand %p236, %p237
    %p239 = pneg %p238
    // Predicated region
    $region45: #{tpu_custom_call.1} parent=5 // pred_check
      _
    $region46: #{tpu_custom_call.1} parent=5 // pred_check_branch
      %241 = sbr.rel (%p238) target = $region48
    $region47: #{tpu_custom_call.1} parent=5 // pred_region
      %s242 = ssub.s32 %s13, 1
      %p243 = scmp.lt.s32.totalorder %s18, 1
      %s244 = scalar_select %p243, %s18, 1
      %s245 = smul.addr %s244, 32
      %s246 = smul.addr %s245, 8
      %s247 = scalar_lea.vmem %s0, %s246
      %p248 = pneg %p39
      %p249 = pneg %p36
      %p250 = pneg %p60
      %p251 = pneg %p57
      %p252 = pneg %p81
      %p253 = pneg %p78
      %p254 = pneg %p102
      %p255 = pneg %p99
      %p256 = pneg %p123
      %p257 = pneg %p120
      %p258 = pneg %p144
      %p259 = pneg %p141
      %p260 = pneg %p165
      %p261 = pneg %p162
      %p262 = pneg %p191
      %p263 = pneg %p188
      %p264 = scmp.lt.s32.totalorder %s18, 1
      %s265 = scalar_select %p264, %s18, 1
      %s266 = smul.addr %s265, 32
      %s267 = smul.addr %s266, 8
      %s268 = scalar_lea.vmem %s7, %s267
      %p269 = scmp.lt.s32.totalorder %s18, 1
      %s270 = scalar_select %p269, %s18, 1
      %s271 = smul.addr %s270, 32
      %s272 = smul.addr %s271, 8
      %s273 = scalar_lea.vmem %s0, %s272
      %p274 = scmp.lt.s32.totalorder %s18, 1
      %s275 = scalar_select %p274, %s18, 1
      %s276 = smul.addr %s275, 32
      %s277 = smul.addr %s276, 8
      %s278 = scalar_lea.vmem %s7, %s277
      %v280 = vld [vmem:[%s273] sm:$0xff]
      %v281 = vld [vmem:[%s273 + $0x8] sm:$0xff]
      %v282 = vld [vmem:[%s273 + $0x10] sm:$0xff]
      %v283 = vld [vmem:[%s273 + $0x18] sm:$0xff]
      %v284 = vld [vmem:[%s273 + $0x20] sm:$0xff]
      %v285 = vld [vmem:[%s273 + $0x28] sm:$0xff]
      %v286 = vld [vmem:[%s273 + $0x30] sm:$0xff]
      %v287 = vld [vmem:[%s273 + $0x38] sm:$0xff]
      %v288 = vld [vmem:[%s273 + $0x40] sm:$0xff]
      %v289 = vld [vmem:[%s273 + $0x48] sm:$0xff]
      %v290 = vld [vmem:[%s273 + $0x50] sm:$0xff]
      %v291 = vld [vmem:[%s273 + $0x58] sm:$0xff]
      %v292 = vld [vmem:[%s273 + $0x60] sm:$0xff]
      %v293 = vld [vmem:[%s273 + $0x68] sm:$0xff]
      %v294 = vld [vmem:[%s273 + $0x70] sm:$0xff]
      %v295 = vld [vmem:[%s273 + $0x78] sm:$0xff]
      %v296 = vld [vmem:[%s273 + $0x80] sm:$0xff]
      %v297 = vld [vmem:[%s273 + $0x88] sm:$0xff]
      %v298 = vld [vmem:[%s273 + $0x90] sm:$0xff]
      %v299 = vld [vmem:[%s273 + $0x98] sm:$0xff]
      %v300 = vld [vmem:[%s273 + $0xa0] sm:$0xff]
      %v301 = vld [vmem:[%s273 + $0xa8] sm:$0xff]
      %v302 = vld [vmem:[%s273 + $0xb0] sm:$0xff]
      %v303 = vld [vmem:[%s273 + $0xb8] sm:$0xff]
      %v304 = vld [vmem:[%s273 + $0xc0] sm:$0xff]
      %v305 = vld [vmem:[%s273 + $0xc8] sm:$0xff]
      %v306 = vld [vmem:[%s273 + $0xd0] sm:$0xff]
      %v307 = vld [vmem:[%s273 + $0xd8] sm:$0xff]
      %v308 = vld [vmem:[%s273 + $0xe0] sm:$0xff]
      %v309 = vld [vmem:[%s273 + $0xe8] sm:$0xff]
      %v310 = vld [vmem:[%s273 + $0xf0] sm:$0xff]
      %v311 = vld [vmem:[%s273 + $0xf8] sm:$0xff]
      %v312 = vld [vmem:[%s1] sm:$0x1]
      %v314 = vperm.slane %v312, 0
      %v316 = vmul.f32 %v280, %v314
      %v317 = vmul.f32 %v281, %v314
      %v318 = vmul.f32 %v282, %v314
      %v319 = vmul.f32 %v283, %v314
      %v320 = vmul.f32 %v284, %v314
      %v321 = vmul.f32 %v285, %v314
      %v322 = vmul.f32 %v286, %v314
      %v323 = vmul.f32 %v287, %v314
      %v324 = vmul.f32 %v288, %v314
      %v325 = vmul.f32 %v289, %v314
      %v326 = vmul.f32 %v290, %v314
      %v327 = vmul.f32 %v291, %v314
      %v328 = vmul.f32 %v292, %v314
      %v329 = vmul.f32 %v293, %v314
      %v330 = vmul.f32 %v294, %v314
      %v331 = vmul.f32 %v295, %v314
      %v332 = vmul.f32 %v296, %v314
      %v333 = vmul.f32 %v297, %v314
      %v334 = vmul.f32 %v298, %v314
      %v335 = vmul.f32 %v299, %v314
      %v336 = vmul.f32 %v300, %v314
      %v337 = vmul.f32 %v301, %v314
      %v338 = vmul.f32 %v302, %v314
      %v339 = vmul.f32 %v303, %v314
      %v340 = vmul.f32 %v304, %v314
      %v341 = vmul.f32 %v305, %v314
      %v342 = vmul.f32 %v306, %v314
      %v343 = vmul.f32 %v307, %v314
      %v344 = vmul.f32 %v308, %v314
      %v345 = vmul.f32 %v309, %v314
      %v346 = vmul.f32 %v310, %v314
      %v347 = vmul.f32 %v311, %v314
      %v348 = vld [vmem:[%s2] sm:$0x1]
      %v350 = vperm.slane %v348, 0
      %v352 = vadd.f32 %v316, %v350
      %v353 = vadd.f32 %v317, %v350
      %v354 = vadd.f32 %v318, %v350
      %v355 = vadd.f32 %v319, %v350
      %v356 = vadd.f32 %v320, %v350
      %v357 = vadd.f32 %v321, %v350
      %v358 = vadd.f32 %v322, %v350
      %v359 = vadd.f32 %v323, %v350
      %v360 = vadd.f32 %v324, %v350
      %v361 = vadd.f32 %v325, %v350
      %v362 = vadd.f32 %v326, %v350
      %v363 = vadd.f32 %v327, %v350
      %v364 = vadd.f32 %v328, %v350
      %v365 = vadd.f32 %v329, %v350
      %v366 = vadd.f32 %v330, %v350
      %v367 = vadd.f32 %v331, %v350
      %v368 = vadd.f32 %v332, %v350
      %v369 = vadd.f32 %v333, %v350
      %v370 = vadd.f32 %v334, %v350
      %v371 = vadd.f32 %v335, %v350
      %v372 = vadd.f32 %v336, %v350
      %v373 = vadd.f32 %v337, %v350
      %v374 = vadd.f32 %v338, %v350
      %v375 = vadd.f32 %v339, %v350
      %v376 = vadd.f32 %v340, %v350
      %v377 = vadd.f32 %v341, %v350
      %v378 = vadd.f32 %v342, %v350
      %v379 = vadd.f32 %v343, %v350
      %v380 = vadd.f32 %v344, %v350
      %v381 = vadd.f32 %v345, %v350
      %v382 = vadd.f32 %v346, %v350
      %v383 = vadd.f32 %v347, %v350
      %v384 = vmax.f32 %v352, 0.0
      %v385 = vmax.f32 %v353, 0.0
      %v386 = vmax.f32 %v354, 0.0
      %v387 = vmax.f32 %v355, 0.0
      %v388 = vmax.f32 %v356, 0.0
      %v389 = vmax.f32 %v357, 0.0
      %v390 = vmax.f32 %v358, 0.0
      %v391 = vmax.f32 %v359, 0.0
      %v392 = vmax.f32 %v360, 0.0
      %v393 = vmax.f32 %v361, 0.0
      %v394 = vmax.f32 %v362, 0.0
      %v395 = vmax.f32 %v363, 0.0
      %v396 = vmax.f32 %v364, 0.0
      %v397 = vmax.f32 %v365, 0.0
      %v398 = vmax.f32 %v366, 0.0
      %v399 = vmax.f32 %v367, 0.0
      %v400 = vmax.f32 %v368, 0.0
      %v401 = vmax.f32 %v369, 0.0
      %v402 = vmax.f32 %v370, 0.0
      %v403 = vmax.f32 %v371, 0.0
      %v404 = vmax.f32 %v372, 0.0
      %v405 = vmax.f32 %v373, 0.0
      %v406 = vmax.f32 %v374, 0.0
      %v407 = vmax.f32 %v375, 0.0
      %v408 = vmax.f32 %v376, 0.0
      %v409 = vmax.f32 %v377, 0.0
      %v410 = vmax.f32 %v378, 0.0
      %v411 = vmax.f32 %v379, 0.0
      %v412 = vmax.f32 %v380, 0.0
      %v413 = vmax.f32 %v381, 0.0
      %v414 = vmax.f32 %v382, 0.0
      %v415 = vmax.f32 %v383, 0.0
      %v416 = vpack.c.bf16 %v385, %v384
      %v417 = vpack.c.bf16 %v387, %v386
      %v418 = vpack.c.bf16 %v389, %v388
      %v419 = vpack.c.bf16 %v391, %v390
      %v420 = vpack.c.bf16 %v393, %v392
      %v421 = vpack.c.bf16 %v395, %v394
      %v422 = vpack.c.bf16 %v397, %v396
      %v423 = vpack.c.bf16 %v399, %v398
      %v424 = vpack.c.bf16 %v401, %v400
      %v425 = vpack.c.bf16 %v403, %v402
      %v426 = vpack.c.bf16 %v405, %v404
      %v427 = vpack.c.bf16 %v407, %v406
      %v428 = vpack.c.bf16 %v409, %v408
      %v429 = vpack.c.bf16 %v411, %v410
      %v430 = vpack.c.bf16 %v413, %v412
      %v431 = vpack.c.bf16 %v415, %v414
      %v432 = vld [vmem:[%s3] sm:$0x3]
      %vm433 = vcmask 31744
      %v435 = vsel %vm433, %v416, 0
      %v438 = vsel %vm433, %v417, 0
      %v441 = vsel %vm433, %v418, 0
      %v444 = vsel %vm433, %v419, 0
      %v447 = vsel %vm433, %v420, 0
      %v450 = vsel %vm433, %v421, 0
      %v453 = vsel %vm433, %v422, 0
      %v456 = vsel %vm433, %v423, 0
      %v459 = vsel %vm433, %v424, 0
      %v462 = vsel %vm433, %v425, 0
      %v465 = vsel %vm433, %v426, 0
      %v468 = vsel %vm433, %v427, 0
      %v471 = vsel %vm433, %v428, 0
      %v474 = vsel %vm433, %v429, 0
      %v477 = vsel %vm433, %v430, 0
      %v480 = vsel %vm433, %v431, 0
      %vm482 = vcmask 1041408
      %v484 = vsel %vm482, %v432, 0
      %486 = vmatpush.bf16.msra.mxu0 0
      %487 = vmatpush.bf16.msra.mxu0 0
      %488 = vmatpush.bf16.msra.mxu0 0
      %489 = vmatpush.bf16.msra.mxu0 0
      %490 = vmatpush.bf16.msra.mxu0 0
      %491 = vmatpush.bf16.msra.mxu0 0
      %492 = vmatpush.bf16.msra.mxu0 0
      %493 = vmatpush.bf16.msra.mxu0 %v484
      %494 = vmatmul.bf16.gmra.mxu0 %v435
      %v495 = vpop.f32.mrf.mxu0
      %v496 = vadd.f32 0.0, %v495
      %v497 = vpop.f32.mrf.mxu0
      %v498 = vadd.f32 0.0, %v497
      %499 = vmatmul.bf16.gmra.mxu0 %v438
      %v500 = vpop.f32.mrf.mxu0
      %v501 = vadd.f32 0.0, %v500
      %v502 = vpop.f32.mrf.mxu0
      %v503 = vadd.f32 0.0, %v502
      %504 = vmatmul.bf16.gmra.mxu0 %v441
      %v505 = vpop.f32.mrf.mxu0
      %v506 = vadd.f32 0.0, %v505
      %v507 = vpop.f32.mrf.mxu0
      %v508 = vadd.f32 0.0, %v507
      %509 = vmatmul.bf16.gmra.mxu0 %v444
      %v510 = vpop.f32.mrf.mxu0
      %v511 = vadd.f32 0.0, %v510
      %v512 = vpop.f32.mrf.mxu0
      %v513 = vadd.f32 0.0, %v512
      %514 = vmatmul.bf16.gmra.mxu0 %v447
      %v515 = vpop.f32.mrf.mxu0
      %v516 = vadd.f32 0.0, %v515
      %v517 = vpop.f32.mrf.mxu0
      %v518 = vadd.f32 0.0, %v517
      %519 = vmatmul.bf16.gmra.mxu0 %v450
      %v520 = vpop.f32.mrf.mxu0
      %v521 = vadd.f32 0.0, %v520
      %v522 = vpop.f32.mrf.mxu0
      %v523 = vadd.f32 0.0, %v522
      %524 = vmatmul.bf16.gmra.mxu0 %v453
      %v525 = vpop.f32.mrf.mxu0
      %v526 = vadd.f32 0.0, %v525
      %v527 = vpop.f32.mrf.mxu0
      %v528 = vadd.f32 0.0, %v527
      %529 = vmatmul.bf16.gmra.mxu0 %v456
      %v530 = vpop.f32.mrf.mxu0
      %v531 = vadd.f32 0.0, %v530
      %v532 = vpop.f32.mrf.mxu0
      %v533 = vadd.f32 0.0, %v532
      %534 = vmatmul.bf16.gmra.mxu0 %v459
      %v535 = vpop.f32.mrf.mxu0
      %v536 = vadd.f32 0.0, %v535
      %v537 = vpop.f32.mrf.mxu0
      %v538 = vadd.f32 0.0, %v537
      %539 = vmatmul.bf16.gmra.mxu0 %v462
      %v540 = vpop.f32.mrf.mxu0
      %v541 = vadd.f32 0.0, %v540
      %v542 = vpop.f32.mrf.mxu0
      %v543 = vadd.f32 0.0, %v542
      %544 = vmatmul.bf16.gmra.mxu0 %v465
      %v545 = vpop.f32.mrf.mxu0
      %v546 = vadd.f32 0.0, %v545
      %v547 = vpop.f32.mrf.mxu0
      %v548 = vadd.f32 0.0, %v547
      %549 = vmatmul.bf16.gmra.mxu0 %v468
      %v550 = vpop.f32.mrf.mxu0
      %v551 = vadd.f32 0.0, %v550
      %v552 = vpop.f32.mrf.mxu0
      %v553 = vadd.f32 0.0, %v552
      %554 = vmatmul.bf16.gmra.mxu0 %v471
      %v555 = vpop.f32.mrf.mxu0
      %v556 = vadd.f32 0.0, %v555
      %v557 = vpop.f32.mrf.mxu0
      %v558 = vadd.f32 0.0, %v557
      %559 = vmatmul.bf16.gmra.mxu0 %v474
      %v560 = vpop.f32.mrf.mxu0
      %v561 = vadd.f32 0.0, %v560
      %v562 = vpop.f32.mrf.mxu0
      %v563 = vadd.f32 0.0, %v562
      %564 = vmatmul.bf16.gmra.mxu0 %v477
      %v565 = vpop.f32.mrf.mxu0
      %v566 = vadd.f32 0.0, %v565
      %v567 = vpop.f32.mrf.mxu0
      %v568 = vadd.f32 0.0, %v567
      %569 = vmatmul.bf16.gmra.mxu0 %v480
      %v570 = vpop.f32.mrf.mxu0
      %v571 = vadd.f32 0.0, %v570
      %v572 = vpop.f32.mrf.mxu0
      %v573 = vadd.f32 0.0, %v572
      %574 = vdwg.mxu0
      %v575 = vld [vmem:[%s4] sm:$0x1]
      %v577 = vperm.slane %v575, 0
      %v579 = vmul.f32 %v496, %v577
      %v580 = vmul.f32 %v498, %v577
      %v581 = vmul.f32 %v501, %v577
      %v582 = vmul.f32 %v503, %v577
      %v583 = vmul.f32 %v506, %v577
      %v584 = vmul.f32 %v508, %v577
      %v585 = vmul.f32 %v511, %v577
      %v586 = vmul.f32 %v513, %v577
      %v587 = vmul.f32 %v516, %v577
      %v588 = vmul.f32 %v518, %v577
      %v589 = vmul.f32 %v521, %v577
      %v590 = vmul.f32 %v523, %v577
      %v591 = vmul.f32 %v526, %v577
      %v592 = vmul.f32 %v528, %v577
      %v593 = vmul.f32 %v531, %v577
      %v594 = vmul.f32 %v533, %v577
      %v595 = vmul.f32 %v536, %v577
      %v596 = vmul.f32 %v538, %v577
      %v597 = vmul.f32 %v541, %v577
      %v598 = vmul.f32 %v543, %v577
      %v599 = vmul.f32 %v546, %v577
      %v600 = vmul.f32 %v548, %v577
      %v601 = vmul.f32 %v551, %v577
      %v602 = vmul.f32 %v553, %v577
      %v603 = vmul.f32 %v556, %v577
      %v604 = vmul.f32 %v558, %v577
      %v605 = vmul.f32 %v561, %v577
      %v606 = vmul.f32 %v563, %v577
      %v607 = vmul.f32 %v566, %v577
      %v608 = vmul.f32 %v568, %v577
      %v609 = vmul.f32 %v571, %v577
      %v610 = vmul.f32 %v573, %v577
      %v611 = vld [vmem:[%s5] sm:$0x1]
      %v613 = vperm.slane %v611, 0
      %v615 = vadd.f32 %v579, %v613
      %v616 = vadd.f32 %v580, %v613
      %v617 = vadd.f32 %v581, %v613
      %v618 = vadd.f32 %v582, %v613
      %v619 = vadd.f32 %v583, %v613
      %v620 = vadd.f32 %v584, %v613
      %v621 = vadd.f32 %v585, %v613
      %v622 = vadd.f32 %v586, %v613
      %v623 = vadd.f32 %v587, %v613
      %v624 = vadd.f32 %v588, %v613
      %v625 = vadd.f32 %v589, %v613
      %v626 = vadd.f32 %v590, %v613
      %v627 = vadd.f32 %v591, %v613
      %v628 = vadd.f32 %v592, %v613
      %v629 = vadd.f32 %v593, %v613
      %v630 = vadd.f32 %v594, %v613
      %v631 = vadd.f32 %v595, %v613
      %v632 = vadd.f32 %v596, %v613
      %v633 = vadd.f32 %v597, %v613
      %v634 = vadd.f32 %v598, %v613
      %v635 = vadd.f32 %v599, %v613
      %v636 = vadd.f32 %v600, %v613
      %v637 = vadd.f32 %v601, %v613
      %v638 = vadd.f32 %v602, %v613
      %v639 = vadd.f32 %v603, %v613
      %v640 = vadd.f32 %v604, %v613
      %v641 = vadd.f32 %v605, %v613
      %v642 = vadd.f32 %v606, %v613
      %v643 = vadd.f32 %v607, %v613
      %v644 = vadd.f32 %v608, %v613
      %v645 = vadd.f32 %v609, %v613
      %v646 = vadd.f32 %v610, %v613
      %v647 = vmax.f32 %v615, 0.0
      %v648 = vmax.f32 %v616, 0.0
      %v649 = vmax.f32 %v617, 0.0
      %v650 = vmax.f32 %v618, 0.0
      %v651 = vmax.f32 %v619, 0.0
      %v652 = vmax.f32 %v620, 0.0
      %v653 = vmax.f32 %v621, 0.0
      %v654 = vmax.f32 %v622, 0.0
      %v655 = vmax.f32 %v623, 0.0
      %v656 = vmax.f32 %v624, 0.0
      %v657 = vmax.f32 %v625, 0.0
      %v658 = vmax.f32 %v626, 0.0
      %v659 = vmax.f32 %v627, 0.0
      %v660 = vmax.f32 %v628, 0.0
      %v661 = vmax.f32 %v629, 0.0
      %v662 = vmax.f32 %v630, 0.0
      %v663 = vmax.f32 %v631, 0.0
      %v664 = vmax.f32 %v632, 0.0
      %v665 = vmax.f32 %v633, 0.0
      %v666 = vmax.f32 %v634, 0.0
      %v667 = vmax.f32 %v635, 0.0
      %v668 = vmax.f32 %v636, 0.0
      %v669 = vmax.f32 %v637, 0.0
      %v670 = vmax.f32 %v638, 0.0
      %v671 = vmax.f32 %v639, 0.0
      %v672 = vmax.f32 %v640, 0.0
      %v673 = vmax.f32 %v641, 0.0
      %v674 = vmax.f32 %v642, 0.0
      %v675 = vmax.f32 %v643, 0.0
      %v676 = vmax.f32 %v644, 0.0
      %v677 = vmax.f32 %v645, 0.0
      %v678 = vmax.f32 %v646, 0.0
      %vm711 = vcmask 1040384
      %v712 = vrot.slane %v647, 7
      %v713 = vrot.slane %v648, 7
      %v714 = vsel %vm711, %v712, %v713
      %v715 = vrot.slane %v649, 7
      %v716 = vrot.slane %v650, 7
      %v717 = vsel %vm711, %v715, %v716
      %v718 = vrot.slane %v651, 7
      %v719 = vrot.slane %v652, 7
      %v720 = vsel %vm711, %v718, %v719
      %v721 = vrot.slane %v653, 7
      %v722 = vrot.slane %v654, 7
      %v723 = vsel %vm711, %v721, %v722
      %v724 = vrot.slane %v655, 7
      %v725 = vrot.slane %v656, 7
      %v726 = vsel %vm711, %v724, %v725
      %v727 = vrot.slane %v657, 7
      %v728 = vrot.slane %v658, 7
      %v729 = vsel %vm711, %v727, %v728
      %v730 = vrot.slane %v659, 7
      %v731 = vrot.slane %v660, 7
      %v732 = vsel %vm711, %v730, %v731
      %v733 = vrot.slane %v661, 7
      %v734 = vrot.slane %v662, 7
      %v735 = vsel %vm711, %v733, %v734
      %v736 = vrot.slane %v663, 7
      %v737 = vrot.slane %v664, 7
      %v738 = vsel %vm711, %v736, %v737
      %v739 = vrot.slane %v665, 7
      %v740 = vrot.slane %v666, 7
      %v741 = vsel %vm711, %v739, %v740
      %v742 = vrot.slane %v667, 7
      %v743 = vrot.slane %v668, 7
      %v744 = vsel %vm711, %v742, %v743
      %v745 = vrot.slane %v669, 7
      %v746 = vrot.slane %v670, 7
      %v747 = vsel %vm711, %v745, %v746
      %v748 = vrot.slane %v671, 7
      %v749 = vrot.slane %v672, 7
      %v750 = vsel %vm711, %v748, %v749
      %v751 = vrot.slane %v673, 7
      %v752 = vrot.slane %v674, 7
      %v753 = vsel %vm711, %v751, %v752
      %v754 = vrot.slane %v675, 7
      %v755 = vrot.slane %v676, 7
      %v756 = vsel %vm711, %v754, %v755
      %v757 = vrot.slane %v677, 7
      %v758 = vrot.slane %v678, 7
      %v759 = vsel %vm711, %v757, %v758
      %v807 = vsel %vm711, 0.0, %v712
      %v808 = vsel %vm711, 0.0, %v715
      %v809 = vsel %vm711, 0.0, %v718
      %v810 = vsel %vm711, 0.0, %v721
      %v811 = vsel %vm711, 0.0, %v724
      %v812 = vsel %vm711, 0.0, %v727
      %v813 = vsel %vm711, 0.0, %v730
      %v814 = vsel %vm711, 0.0, %v733
      %v815 = vsel %vm711, 0.0, %v736
      %v816 = vsel %vm711, 0.0, %v739
      %v817 = vsel %vm711, 0.0, %v742
      %v818 = vsel %vm711, 0.0, %v745
      %v819 = vsel %vm711, 0.0, %v748
      %v820 = vsel %vm711, 0.0, %v751
      %v821 = vsel %vm711, 0.0, %v754
      %v822 = vsel %vm711, 0.0, %v757
      %v823 = vsel %vm711, %v713, 0.0
      %v824 = vsel %vm711, %v716, 0.0
      %v825 = vsel %vm711, %v719, 0.0
      %v826 = vsel %vm711, %v722, 0.0
      %v827 = vsel %vm711, %v725, 0.0
      %v828 = vsel %vm711, %v728, 0.0
      %v829 = vsel %vm711, %v731, 0.0
      %v830 = vsel %vm711, %v734, 0.0
      %v831 = vsel %vm711, %v737, 0.0
      %v832 = vsel %vm711, %v740, 0.0
      %v833 = vsel %vm711, %v743, 0.0
      %v834 = vsel %vm711, %v746, 0.0
      %v835 = vsel %vm711, %v749, 0.0
      %v836 = vsel %vm711, %v752, 0.0
      %v837 = vsel %vm711, %v755, 0.0
      %v838 = vsel %vm711, %v758, 0.0
      %vm870 = vcmask 1046528
      %v871 = vrot.slane 0.0, 1
      %v872 = vsel %vm870, %v871, %v871
      %v873 = vrot.slane %v807, 1
      %v874 = vrot.slane %v714, 1
      %v875 = vsel %vm870, %v873, %v874
      %v876 = vrot.slane %v823, 1
      %v877 = vsel %vm870, %v874, %v876
      %v878 = vrot.slane %v808, 1
      %v879 = vrot.slane %v717, 1
      %v880 = vsel %vm870, %v878, %v879
      %v881 = vrot.slane %v824, 1
      %v882 = vsel %vm870, %v879, %v881
      %v883 = vrot.slane %v809, 1
      %v884 = vrot.slane %v720, 1
      %v885 = vsel %vm870, %v883, %v884
      %v886 = vrot.slane %v825, 1
      %v887 = vsel %vm870, %v884, %v886
      %v888 = vrot.slane %v810, 1
      %v889 = vrot.slane %v723, 1
      %v890 = vsel %vm870, %v888, %v889
      %v891 = vrot.slane %v826, 1
      %v892 = vsel %vm870, %v889, %v891
      %v893 = vrot.slane %v811, 1
      %v894 = vrot.slane %v726, 1
      %v895 = vsel %vm870, %v893, %v894
      %v896 = vrot.slane %v827, 1
      %v897 = vsel %vm870, %v894, %v896
      %v898 = vrot.slane %v812, 1
      %v899 = vrot.slane %v729, 1
      %v900 = vsel %vm870, %v898, %v899
      %v901 = vrot.slane %v828, 1
      %v902 = vsel %vm870, %v899, %v901
      %v903 = vrot.slane %v813, 1
      %v904 = vrot.slane %v732, 1
      %v905 = vsel %vm870, %v903, %v904
      %v906 = vrot.slane %v829, 1
      %v907 = vsel %vm870, %v904, %v906
      %v908 = vrot.slane %v814, 1
      %v909 = vrot.slane %v735, 1
      %v910 = vsel %vm870, %v908, %v909
      %v911 = vrot.slane %v830, 1
      %v912 = vsel %vm870, %v909, %v911
      %v913 = vrot.slane %v815, 1
      %v914 = vrot.slane %v738, 1
      %v915 = vsel %vm870, %v913, %v914
      %v916 = vrot.slane %v831, 1
      %v917 = vsel %vm870, %v914, %v916
      %v918 = vrot.slane %v816, 1
      %v919 = vrot.slane %v741, 1
      %v920 = vsel %vm870, %v918, %v919
      %v921 = vrot.slane %v832, 1
      %v922 = vsel %vm870, %v919, %v921
      %v923 = vrot.slane %v817, 1
      %v924 = vrot.slane %v744, 1
      %v925 = vsel %vm870, %v923, %v924
      %v926 = vrot.slane %v833, 1
      %v927 = vsel %vm870, %v924, %v926
      %v928 = vrot.slane %v818, 1
      %v929 = vrot.slane %v747, 1
      %v930 = vsel %vm870, %v928, %v929
      %v931 = vrot.slane %v834, 1
      %v932 = vsel %vm870, %v929, %v931
      %v933 = vrot.slane %v819, 1
      %v934 = vrot.slane %v750, 1
      %v935 = vsel %vm870, %v933, %v934
      %v936 = vrot.slane %v835, 1
      %v937 = vsel %vm870, %v934, %v936
      %v938 = vrot.slane %v820, 1
      %v939 = vrot.slane %v753, 1
      %v940 = vsel %vm870, %v938, %v939
      %v941 = vrot.slane %v836, 1
      %v942 = vsel %vm870, %v939, %v941
      %v943 = vrot.slane %v821, 1
      %v944 = vrot.slane %v756, 1
      %v945 = vsel %vm870, %v943, %v944
      %v946 = vrot.slane %v837, 1
      %v947 = vsel %vm870, %v944, %v946
      %vm948 = vcmask 1045504
      %v949 = vrot.slane 0.0, 2
      %v950 = vsel %vm948, %v949, %v949
      %v951 = vrot.slane %v807, 2
      %v952 = vrot.slane %v714, 2
      %v953 = vsel %vm948, %v951, %v952
      %v954 = vrot.slane %v823, 2
      %v955 = vsel %vm948, %v952, %v954
      %v956 = vrot.slane %v808, 2
      %v957 = vrot.slane %v717, 2
      %v958 = vsel %vm948, %v956, %v957
      %v959 = vrot.slane %v824, 2
      %v960 = vsel %vm948, %v957, %v959
      %v961 = vrot.slane %v809, 2
      %v962 = vrot.slane %v720, 2
      %v963 = vsel %vm948, %v961, %v962
      %v964 = vrot.slane %v825, 2
      %v965 = vsel %vm948, %v962, %v964
      %v966 = vrot.slane %v810, 2
      %v967 = vrot.slane %v723, 2
      %v968 = vsel %vm948, %v966, %v967
      %v969 = vrot.slane %v826, 2
      %v970 = vsel %vm948, %v967, %v969
      %v971 = vrot.slane %v811, 2
      %v972 = vrot.slane %v726, 2
      %v973 = vsel %vm948, %v971, %v972
      %v974 = vrot.slane %v827, 2
      %v975 = vsel %vm948, %v972, %v974
      %v976 = vrot.slane %v812, 2
      %v977 = vrot.slane %v729, 2
      %v978 = vsel %vm948, %v976, %v977
      %v979 = vrot.slane %v828, 2
      %v980 = vsel %vm948, %v977, %v979
      %v981 = vrot.slane %v813, 2
      %v982 = vrot.slane %v732, 2
      %v983 = vsel %vm948, %v981, %v982
      %v984 = vrot.slane %v829, 2
      %v985 = vsel %vm948, %v982, %v984
      %v986 = vrot.slane %v814, 2
      %v987 = vrot.slane %v735, 2
      %v988 = vsel %vm948, %v986, %v987
      %v989 = vrot.slane %v830, 2
      %v990 = vsel %vm948, %v987, %v989
      %v991 = vrot.slane %v815, 2
      %v992 = vrot.slane %v738, 2
      %v993 = vsel %vm948, %v991, %v992
      %v994 = vrot.slane %v831, 2
      %v995 = vsel %vm948, %v992, %v994
      %v996 = vrot.slane %v816, 2
      %v997 = vrot.slane %v741, 2
      %v998 = vsel %vm948, %v996, %v997
      %v999 = vrot.slane %v832, 2
      %v1000 = vsel %vm948, %v997, %v999
      %v1001 = vrot.slane %v817, 2
      %v1002 = vrot.slane %v744, 2
      %v1003 = vsel %vm948, %v1001, %v1002
      %v1004 = vrot.slane %v833, 2
      %v1005 = vsel %vm948, %v1002, %v1004
      %v1006 = vrot.slane %v818, 2
      %v1007 = vrot.slane %v747, 2
      %v1008 = vsel %vm948, %v1006, %v1007
      %v1009 = vrot.slane %v834, 2
      %v1010 = vsel %vm948, %v1007, %v1009
      %v1011 = vrot.slane %v819, 2
      %v1012 = vrot.slane %v750, 2
      %v1013 = vsel %vm948, %v1011, %v1012
      %v1014 = vrot.slane %v835, 2
      %v1015 = vsel %vm948, %v1012, %v1014
      %v1016 = vrot.slane %v820, 2
      %v1017 = vrot.slane %v753, 2
      %v1018 = vsel %vm948, %v1016, %v1017
      %v1019 = vrot.slane %v836, 2
      %v1020 = vsel %vm948, %v1017, %v1019
      %v1021 = vrot.slane %v821, 2
      %v1022 = vrot.slane %v756, 2
      %v1023 = vsel %vm948, %v1021, %v1022
      %v1024 = vrot.slane %v837, 2
      %v1025 = vsel %vm948, %v1022, %v1024
      %v1028 = vrot.slane %v822, 1
      %v1029 = vrot.slane %v759, 1
      %v1030 = vsel %vm870, %v1028, %v1029
      %v1031 = vrot.slane %v838, 1
      %v1032 = vsel %vm870, %v1029, %v1031
      %v1033 = vrot.slane %v822, 2
      %v1034 = vrot.slane %v759, 2
      %v1035 = vsel %vm948, %v1033, %v1034
      %v1036 = vrot.slane %v838, 2
      %v1037 = vsel %vm948, %v1034, %v1036
      %1069 = vrot.lane.b32.xlu0 %v872, 16
      %v1070 = vpop.permute.xlu0 %1069
      %1071 = vrot.lane.b32.xlu0 %v875, 16
      %v1072 = vpop.permute.xlu0 %1071
      %1073 = vrot.lane.b32.xlu0 %v877, 16
      %v1074 = vpop.permute.xlu0 %1073
      %1075 = vrot.lane.b32.xlu0 %v880, 16
      %v1076 = vpop.permute.xlu0 %1075
      %1077 = vrot.lane.b32.xlu0 %v882, 16
      %v1078 = vpop.permute.xlu0 %1077
      %1079 = vrot.lane.b32.xlu0 %v885, 16
      %v1080 = vpop.permute.xlu0 %1079
      %1081 = vrot.lane.b32.xlu0 %v887, 16
      %v1082 = vpop.permute.xlu0 %1081
      %1083 = vrot.lane.b32.xlu0 %v890, 16
      %v1084 = vpop.permute.xlu0 %1083
      %1085 = vrot.lane.b32.xlu0 %v892, 16
      %v1086 = vpop.permute.xlu0 %1085
      %1087 = vrot.lane.b32.xlu0 %v895, 16
      %v1088 = vpop.permute.xlu0 %1087
      %1089 = vrot.lane.b32.xlu0 %v897, 16
      %v1090 = vpop.permute.xlu0 %1089
      %1091 = vrot.lane.b32.xlu0 %v900, 16
      %v1092 = vpop.permute.xlu0 %1091
      %1093 = vrot.lane.b32.xlu0 %v902, 16
      %v1094 = vpop.permute.xlu0 %1093
      %1095 = vrot.lane.b32.xlu0 %v905, 16
      %v1096 = vpop.permute.xlu0 %1095
      %1097 = vrot.lane.b32.xlu0 %v907, 16
      %v1098 = vpop.permute.xlu0 %1097
      %1099 = vrot.lane.b32.xlu0 %v910, 16
      %v1100 = vpop.permute.xlu0 %1099
      %1101 = vrot.lane.b32.xlu0 %v912, 16
      %v1102 = vpop.permute.xlu0 %1101
      %1103 = vrot.lane.b32.xlu0 %v915, 16
      %v1104 = vpop.permute.xlu0 %1103
      %1105 = vrot.lane.b32.xlu0 %v917, 16
      %v1106 = vpop.permute.xlu0 %1105
      %1107 = vrot.lane.b32.xlu0 %v920, 16
      %v1108 = vpop.permute.xlu0 %1107
      %1109 = vrot.lane.b32.xlu0 %v922, 16
      %v1110 = vpop.permute.xlu0 %1109
      %1111 = vrot.lane.b32.xlu0 %v925, 16
      %v1112 = vpop.permute.xlu0 %1111
      %1113 = vrot.lane.b32.xlu0 %v927, 16
      %v1114 = vpop.permute.xlu0 %1113
      %1115 = vrot.lane.b32.xlu0 %v930, 16
      %v1116 = vpop.permute.xlu0 %1115
      %1117 = vrot.lane.b32.xlu0 %v932, 16
      %v1118 = vpop.permute.xlu0 %1117
      %1119 = vrot.lane.b32.xlu0 %v935, 16
      %v1120 = vpop.permute.xlu0 %1119
      %1121 = vrot.lane.b32.xlu0 %v937, 16
      %v1122 = vpop.permute.xlu0 %1121
      %1123 = vrot.lane.b32.xlu0 %v940, 16
      %v1124 = vpop.permute.xlu0 %1123
      %1125 = vrot.lane.b32.xlu0 %v942, 16
      %v1126 = vpop.permute.xlu0 %1125
      %1127 = vrot.lane.b32.xlu0 %v945, 16
      %v1128 = vpop.permute.xlu0 %1127
      %1129 = vrot.lane.b32.xlu0 %v947, 16
      %v1130 = vpop.permute.xlu0 %1129
      %1162 = vrot.lane.b32.xlu0 %v950, 32
      %v1163 = vpop.permute.xlu0 %1162
      %1164 = vrot.lane.b32.xlu0 %v953, 32
      %v1165 = vpop.permute.xlu0 %1164
      %1166 = vrot.lane.b32.xlu0 %v955, 32
      %v1167 = vpop.permute.xlu0 %1166
      %1168 = vrot.lane.b32.xlu0 %v958, 32
      %v1169 = vpop.permute.xlu0 %1168
      %1170 = vrot.lane.b32.xlu0 %v960, 32
      %v1171 = vpop.permute.xlu0 %1170
      %1172 = vrot.lane.b32.xlu0 %v963, 32
      %v1173 = vpop.permute.xlu0 %1172
      %1174 = vrot.lane.b32.xlu0 %v965, 32
      %v1175 = vpop.permute.xlu0 %1174
      %1176 = vrot.lane.b32.xlu0 %v968, 32
      %v1177 = vpop.permute.xlu0 %1176
      %1178 = vrot.lane.b32.xlu0 %v970, 32
      %v1179 = vpop.permute.xlu0 %1178
      %1180 = vrot.lane.b32.xlu0 %v973, 32
      %v1181 = vpop.permute.xlu0 %1180
      %1182 = vrot.lane.b32.xlu0 %v975, 32
      %v1183 = vpop.permute.xlu0 %1182
      %1184 = vrot.lane.b32.xlu0 %v978, 32
      %v1185 = vpop.permute.xlu0 %1184
      %1186 = vrot.lane.b32.xlu0 %v980, 32
      %v1187 = vpop.permute.xlu0 %1186
      %1188 = vrot.lane.b32.xlu0 %v983, 32
      %v1189 = vpop.permute.xlu0 %1188
      %1190 = vrot.lane.b32.xlu0 %v985, 32
      %v1191 = vpop.permute.xlu0 %1190
      %1192 = vrot.lane.b32.xlu0 %v988, 32
      %v1193 = vpop.permute.xlu0 %1192
      %1194 = vrot.lane.b32.xlu0 %v990, 32
      %v1195 = vpop.permute.xlu0 %1194
      %1196 = vrot.lane.b32.xlu0 %v993, 32
      %v1197 = vpop.permute.xlu0 %1196
      %1198 = vrot.lane.b32.xlu0 %v995, 32
      %v1199 = vpop.permute.xlu0 %1198
      %1200 = vrot.lane.b32.xlu0 %v998, 32
      %v1201 = vpop.permute.xlu0 %1200
      %1202 = vrot.lane.b32.xlu0 %v1000, 32
      %v1203 = vpop.permute.xlu0 %1202
      %1204 = vrot.lane.b32.xlu0 %v1003, 32
      %v1205 = vpop.permute.xlu0 %1204
      %1206 = vrot.lane.b32.xlu0 %v1005, 32
      %v1207 = vpop.permute.xlu0 %1206
      %1208 = vrot.lane.b32.xlu0 %v1008, 32
      %v1209 = vpop.permute.xlu0 %1208
      %1210 = vrot.lane.b32.xlu0 %v1010, 32
      %v1211 = vpop.permute.xlu0 %1210
      %1212 = vrot.lane.b32.xlu0 %v1013, 32
      %v1213 = vpop.permute.xlu0 %1212
      %1214 = vrot.lane.b32.xlu0 %v1015, 32
      %v1215 = vpop.permute.xlu0 %1214
      %1216 = vrot.lane.b32.xlu0 %v1018, 32
      %v1217 = vpop.permute.xlu0 %1216
      %1218 = vrot.lane.b32.xlu0 %v1020, 32
      %v1219 = vpop.permute.xlu0 %1218
      %1220 = vrot.lane.b32.xlu0 %v1023, 32
      %v1221 = vpop.permute.xlu0 %1220
      %1222 = vrot.lane.b32.xlu0 %v1025, 32
      %v1223 = vpop.permute.xlu0 %1222
      %1255 = vrot.lane.b32.xlu0 %v807, 48
      %v1256 = vpop.permute.xlu0 %1255
      %1257 = vrot.lane.b32.xlu0 %v714, 48
      %v1258 = vpop.permute.xlu0 %1257
      %1259 = vrot.lane.b32.xlu0 %v808, 48
      %v1260 = vpop.permute.xlu0 %1259
      %1261 = vrot.lane.b32.xlu0 %v717, 48
      %v1262 = vpop.permute.xlu0 %1261
      %1263 = vrot.lane.b32.xlu0 %v809, 48
      %v1264 = vpop.permute.xlu0 %1263
      %1265 = vrot.lane.b32.xlu0 %v720, 48
      %v1266 = vpop.permute.xlu0 %1265
      %1267 = vrot.lane.b32.xlu0 %v810, 48
      %v1268 = vpop.permute.xlu0 %1267
      %1269 = vrot.lane.b32.xlu0 %v723, 48
      %v1270 = vpop.permute.xlu0 %1269
      %1271 = vrot.lane.b32.xlu0 %v811, 48
      %v1272 = vpop.permute.xlu0 %1271
      %1273 = vrot.lane.b32.xlu0 %v726, 48
      %v1274 = vpop.permute.xlu0 %1273
      %1275 = vrot.lane.b32.xlu0 %v812, 48
      %v1276 = vpop.permute.xlu0 %1275
      %1277 = vrot.lane.b32.xlu0 %v729, 48
      %v1278 = vpop.permute.xlu0 %1277
      %1279 = vrot.lane.b32.xlu0 %v813, 48
      %v1280 = vpop.permute.xlu0 %1279
      %1281 = vrot.lane.b32.xlu0 %v732, 48
      %v1282 = vpop.permute.xlu0 %1281
      %1283 = vrot.lane.b32.xlu0 %v814, 48
      %v1284 = vpop.permute.xlu0 %1283
      %1285 = vrot.lane.b32.xlu0 %v735, 48
      %v1286 = vpop.permute.xlu0 %1285
      %1287 = vrot.lane.b32.xlu0 %v815, 48
      %v1288 = vpop.permute.xlu0 %1287
      %1289 = vrot.lane.b32.xlu0 %v738, 48
      %v1290 = vpop.permute.xlu0 %1289
      %1291 = vrot.lane.b32.xlu0 %v816, 48
      %v1292 = vpop.permute.xlu0 %1291
      %1293 = vrot.lane.b32.xlu0 %v741, 48
      %v1294 = vpop.permute.xlu0 %1293
      %1295 = vrot.lane.b32.xlu0 %v817, 48
      %v1296 = vpop.permute.xlu0 %1295
      %1297 = vrot.lane.b32.xlu0 %v744, 48
      %v1298 = vpop.permute.xlu0 %1297
      %1299 = vrot.lane.b32.xlu0 %v818, 48
      %v1300 = vpop.permute.xlu0 %1299
      %1301 = vrot.lane.b32.xlu0 %v747, 48
      %v1302 = vpop.permute.xlu0 %1301
      %1303 = vrot.lane.b32.xlu0 %v819, 48
      %v1304 = vpop.permute.xlu0 %1303
      %1305 = vrot.lane.b32.xlu0 %v750, 48
      %v1306 = vpop.permute.xlu0 %1305
      %1307 = vrot.lane.b32.xlu0 %v820, 48
      %v1308 = vpop.permute.xlu0 %1307
      %1309 = vrot.lane.b32.xlu0 %v753, 48
      %v1310 = vpop.permute.xlu0 %1309
      %1311 = vrot.lane.b32.xlu0 %v821, 48
      %v1312 = vpop.permute.xlu0 %1311
      %1313 = vrot.lane.b32.xlu0 %v756, 48
      %v1314 = vpop.permute.xlu0 %1313
      %1315 = vrot.lane.b32.xlu0 %v822, 48
      %v1316 = vpop.permute.xlu0 %1315
      %1317 = vrot.lane.b32.xlu0 %v759, 48
      %v1318 = vpop.permute.xlu0 %1317
      %1351 = vrot.lane.b32.xlu0 %v875, 64
      %v1352 = vpop.permute.xlu0 %1351
      %1353 = vrot.lane.b32.xlu0 %v877, 64
      %v1354 = vpop.permute.xlu0 %1353
      %1355 = vrot.lane.b32.xlu0 %v880, 64
      %v1356 = vpop.permute.xlu0 %1355
      %1357 = vrot.lane.b32.xlu0 %v882, 64
      %v1358 = vpop.permute.xlu0 %1357
      %1359 = vrot.lane.b32.xlu0 %v885, 64
      %v1360 = vpop.permute.xlu0 %1359
      %1361 = vrot.lane.b32.xlu0 %v887, 64
      %v1362 = vpop.permute.xlu0 %1361
      %1363 = vrot.lane.b32.xlu0 %v890, 64
      %v1364 = vpop.permute.xlu0 %1363
      %1365 = vrot.lane.b32.xlu0 %v892, 64
      %v1366 = vpop.permute.xlu0 %1365
      %1367 = vrot.lane.b32.xlu0 %v895, 64
      %v1368 = vpop.permute.xlu0 %1367
      %1369 = vrot.lane.b32.xlu0 %v897, 64
      %v1370 = vpop.permute.xlu0 %1369
      %1371 = vrot.lane.b32.xlu0 %v900, 64
      %v1372 = vpop.permute.xlu0 %1371
      %1373 = vrot.lane.b32.xlu0 %v902, 64
      %v1374 = vpop.permute.xlu0 %1373
      %1375 = vrot.lane.b32.xlu0 %v905, 64
      %v1376 = vpop.permute.xlu0 %1375
      %1377 = vrot.lane.b32.xlu0 %v907, 64
      %v1378 = vpop.permute.xlu0 %1377
      %1379 = vrot.lane.b32.xlu0 %v910, 64
      %v1380 = vpop.permute.xlu0 %1379
      %1381 = vrot.lane.b32.xlu0 %v912, 64
      %v1382 = vpop.permute.xlu0 %1381
      %1383 = vrot.lane.b32.xlu0 %v915, 64
      %v1384 = vpop.permute.xlu0 %1383
      %1385 = vrot.lane.b32.xlu0 %v917, 64
      %v1386 = vpop.permute.xlu0 %1385
      %1387 = vrot.lane.b32.xlu0 %v920, 64
      %v1388 = vpop.permute.xlu0 %1387
      %1389 = vrot.lane.b32.xlu0 %v922, 64
      %v1390 = vpop.permute.xlu0 %1389
      %1391 = vrot.lane.b32.xlu0 %v925, 64
      %v1392 = vpop.permute.xlu0 %1391
      %1393 = vrot.lane.b32.xlu0 %v927, 64
      %v1394 = vpop.permute.xlu0 %1393
      %1395 = vrot.lane.b32.xlu0 %v930, 64
      %v1396 = vpop.permute.xlu0 %1395
      %1397 = vrot.lane.b32.xlu0 %v932, 64
      %v1398 = vpop.permute.xlu0 %1397
      %1399 = vrot.lane.b32.xlu0 %v935, 64
      %v1400 = vpop.permute.xlu0 %1399
      %1401 = vrot.lane.b32.xlu0 %v937, 64
      %v1402 = vpop.permute.xlu0 %1401
      %1403 = vrot.lane.b32.xlu0 %v940, 64
      %v1404 = vpop.permute.xlu0 %1403
      %1405 = vrot.lane.b32.xlu0 %v942, 64
      %v1406 = vpop.permute.xlu0 %1405
      %1407 = vrot.lane.b32.xlu0 %v945, 64
      %v1408 = vpop.permute.xlu0 %1407
      %1409 = vrot.lane.b32.xlu0 %v947, 64
      %v1410 = vpop.permute.xlu0 %1409
      %1411 = vrot.lane.b32.xlu0 %v1030, 64
      %v1412 = vpop.permute.xlu0 %1411
      %1413 = vrot.lane.b32.xlu0 %v1032, 64
      %v1414 = vpop.permute.xlu0 %1413
      %1447 = vrot.lane.b32.xlu0 %v953, 80
      %v1448 = vpop.permute.xlu0 %1447
      %1449 = vrot.lane.b32.xlu0 %v955, 80
      %v1450 = vpop.permute.xlu0 %1449
      %1451 = vrot.lane.b32.xlu0 %v958, 80
      %v1452 = vpop.permute.xlu0 %1451
      %1453 = vrot.lane.b32.xlu0 %v960, 80
      %v1454 = vpop.permute.xlu0 %1453
      %1455 = vrot.lane.b32.xlu0 %v963, 80
      %v1456 = vpop.permute.xlu0 %1455
      %1457 = vrot.lane.b32.xlu0 %v965, 80
      %v1458 = vpop.permute.xlu0 %1457
      %1459 = vrot.lane.b32.xlu0 %v968, 80
      %v1460 = vpop.permute.xlu0 %1459
      %1461 = vrot.lane.b32.xlu0 %v970, 80
      %v1462 = vpop.permute.xlu0 %1461
      %1463 = vrot.lane.b32.xlu0 %v973, 80
      %v1464 = vpop.permute.xlu0 %1463
      %1465 = vrot.lane.b32.xlu0 %v975, 80
      %v1466 = vpop.permute.xlu0 %1465
      %1467 = vrot.lane.b32.xlu0 %v978, 80
      %v1468 = vpop.permute.xlu0 %1467
      %1469 = vrot.lane.b32.xlu0 %v980, 80
      %v1470 = vpop.permute.xlu0 %1469
      %1471 = vrot.lane.b32.xlu0 %v983, 80
      %v1472 = vpop.permute.xlu0 %1471
      %1473 = vrot.lane.b32.xlu0 %v985, 80
      %v1474 = vpop.permute.xlu0 %1473
      %1475 = vrot.lane.b32.xlu0 %v988, 80
      %v1476 = vpop.permute.xlu0 %1475
      %1477 = vrot.lane.b32.xlu0 %v990, 80
      %v1478 = vpop.permute.xlu0 %1477
      %1479 = vrot.lane.b32.xlu0 %v993, 80
      %v1480 = vpop.permute.xlu0 %1479
      %1481 = vrot.lane.b32.xlu0 %v995, 80
      %v1482 = vpop.permute.xlu0 %1481
      %1483 = vrot.lane.b32.xlu0 %v998, 80
      %v1484 = vpop.permute.xlu0 %1483
      %1485 = vrot.lane.b32.xlu0 %v1000, 80
      %v1486 = vpop.permute.xlu0 %1485
      %1487 = vrot.lane.b32.xlu0 %v1003, 80
      %v1488 = vpop.permute.xlu0 %1487
      %1489 = vrot.lane.b32.xlu0 %v1005, 80
      %v1490 = vpop.permute.xlu0 %1489
      %1491 = vrot.lane.b32.xlu0 %v1008, 80
      %v1492 = vpop.permute.xlu0 %1491
      %1493 = vrot.lane.b32.xlu0 %v1010, 80
      %v1494 = vpop.permute.xlu0 %1493
      %1495 = vrot.lane.b32.xlu0 %v1013, 80
      %v1496 = vpop.permute.xlu0 %1495
      %1497 = vrot.lane.b32.xlu0 %v1015, 80
      %v1498 = vpop.permute.xlu0 %1497
      %1499 = vrot.lane.b32.xlu0 %v1018, 80
      %v1500 = vpop.permute.xlu0 %1499
      %1501 = vrot.lane.b32.xlu0 %v1020, 80
      %v1502 = vpop.permute.xlu0 %1501
      %1503 = vrot.lane.b32.xlu0 %v1023, 80
      %v1504 = vpop.permute.xlu0 %1503
      %1505 = vrot.lane.b32.xlu0 %v1025, 80
      %v1506 = vpop.permute.xlu0 %1505
      %1507 = vrot.lane.b32.xlu0 %v1035, 80
      %v1508 = vpop.permute.xlu0 %1507
      %1509 = vrot.lane.b32.xlu0 %v1037, 80
      %v1510 = vpop.permute.xlu0 %1509
      %1543 = vrot.lane.b32.xlu0 %v808, 96
      %v1544 = vpop.permute.xlu0 %1543
      %1545 = vrot.lane.b32.xlu0 %v717, 96
      %v1546 = vpop.permute.xlu0 %1545
      %1547 = vrot.lane.b32.xlu0 %v809, 96
      %v1548 = vpop.permute.xlu0 %1547
      %1549 = vrot.lane.b32.xlu0 %v720, 96
      %v1550 = vpop.permute.xlu0 %1549
      %1551 = vrot.lane.b32.xlu0 %v810, 96
      %v1552 = vpop.permute.xlu0 %1551
      %1553 = vrot.lane.b32.xlu0 %v723, 96
      %v1554 = vpop.permute.xlu0 %1553
      %1555 = vrot.lane.b32.xlu0 %v811, 96
      %v1556 = vpop.permute.xlu0 %1555
      %1557 = vrot.lane.b32.xlu0 %v726, 96
      %v1558 = vpop.permute.xlu0 %1557
      %1559 = vrot.lane.b32.xlu0 %v812, 96
      %v1560 = vpop.permute.xlu0 %1559
      %1561 = vrot.lane.b32.xlu0 %v729, 96
      %v1562 = vpop.permute.xlu0 %1561
      %1563 = vrot.lane.b32.xlu0 %v813, 96
      %v1564 = vpop.permute.xlu0 %1563
      %1565 = vrot.lane.b32.xlu0 %v732, 96
      %v1566 = vpop.permute.xlu0 %1565
      %1567 = vrot.lane.b32.xlu0 %v814, 96
      %v1568 = vpop.permute.xlu0 %1567
      %1569 = vrot.lane.b32.xlu0 %v735, 96
      %v1570 = vpop.permute.xlu0 %1569
      %1571 = vrot.lane.b32.xlu0 %v815, 96
      %v1572 = vpop.permute.xlu0 %1571
      %1573 = vrot.lane.b32.xlu0 %v738, 96
      %v1574 = vpop.permute.xlu0 %1573
      %1575 = vrot.lane.b32.xlu0 %v816, 96
      %v1576 = vpop.permute.xlu0 %1575
      %1577 = vrot.lane.b32.xlu0 %v741, 96
      %v1578 = vpop.permute.xlu0 %1577
      %1579 = vrot.lane.b32.xlu0 %v817, 96
      %v1580 = vpop.permute.xlu0 %1579
      %1581 = vrot.lane.b32.xlu0 %v744, 96
      %v1582 = vpop.permute.xlu0 %1581
      %1583 = vrot.lane.b32.xlu0 %v818, 96
      %v1584 = vpop.permute.xlu0 %1583
      %1585 = vrot.lane.b32.xlu0 %v747, 96
      %v1586 = vpop.permute.xlu0 %1585
      %1587 = vrot.lane.b32.xlu0 %v819, 96
      %v1588 = vpop.permute.xlu0 %1587
      %1589 = vrot.lane.b32.xlu0 %v750, 96
      %v1590 = vpop.permute.xlu0 %1589
      %1591 = vrot.lane.b32.xlu0 %v820, 96
      %v1592 = vpop.permute.xlu0 %1591
      %1593 = vrot.lane.b32.xlu0 %v753, 96
      %v1594 = vpop.permute.xlu0 %1593
      %1595 = vrot.lane.b32.xlu0 %v821, 96
      %v1596 = vpop.permute.xlu0 %1595
      %1597 = vrot.lane.b32.xlu0 %v756, 96
      %v1598 = vpop.permute.xlu0 %1597
      %1599 = vrot.lane.b32.xlu0 %v822, 96
      %v1600 = vpop.permute.xlu0 %1599
      %1601 = vrot.lane.b32.xlu0 %v759, 96
      %v1602 = vpop.permute.xlu0 %1601
      %1603 = vrot.lane.b32.xlu0 0.0, 96
      %v1604 = vpop.permute.xlu0 %1603
      %1636 = vrot.lane.b32.xlu0 %v880, 112
      %v1637 = vpop.permute.xlu0 %1636
      %1638 = vrot.lane.b32.xlu0 %v882, 112
      %v1639 = vpop.permute.xlu0 %1638
      %1640 = vrot.lane.b32.xlu0 %v885, 112
      %v1641 = vpop.permute.xlu0 %1640
      %1642 = vrot.lane.b32.xlu0 %v887, 112
      %v1643 = vpop.permute.xlu0 %1642
      %1644 = vrot.lane.b32.xlu0 %v890, 112
      %v1645 = vpop.permute.xlu0 %1644
      %1646 = vrot.lane.b32.xlu0 %v892, 112
      %v1647 = vpop.permute.xlu0 %1646
      %1648 = vrot.lane.b32.xlu0 %v895, 112
      %v1649 = vpop.permute.xlu0 %1648
      %1650 = vrot.lane.b32.xlu0 %v897, 112
      %v1651 = vpop.permute.xlu0 %1650
      %1652 = vrot.lane.b32.xlu0 %v900, 112
      %v1653 = vpop.permute.xlu0 %1652
      %1654 = vrot.lane.b32.xlu0 %v902, 112
      %v1655 = vpop.permute.xlu0 %1654
      %1656 = vrot.lane.b32.xlu0 %v905, 112
      %v1657 = vpop.permute.xlu0 %1656
      %1658 = vrot.lane.b32.xlu0 %v907, 112
      %v1659 = vpop.permute.xlu0 %1658
      %1660 = vrot.lane.b32.xlu0 %v910, 112
      %v1661 = vpop.permute.xlu0 %1660
      %1662 = vrot.lane.b32.xlu0 %v912, 112
      %v1663 = vpop.permute.xlu0 %1662
      %1664 = vrot.lane.b32.xlu0 %v915, 112
      %v1665 = vpop.permute.xlu0 %1664
      %1666 = vrot.lane.b32.xlu0 %v917, 112
      %v1667 = vpop.permute.xlu0 %1666
      %1668 = vrot.lane.b32.xlu0 %v920, 112
      %v1669 = vpop.permute.xlu0 %1668
      %1670 = vrot.lane.b32.xlu0 %v922, 112
      %v1671 = vpop.permute.xlu0 %1670
      %1672 = vrot.lane.b32.xlu0 %v925, 112
      %v1673 = vpop.permute.xlu0 %1672
      %1674 = vrot.lane.b32.xlu0 %v927, 112
      %v1675 = vpop.permute.xlu0 %1674
      %1676 = vrot.lane.b32.xlu0 %v930, 112
      %v1677 = vpop.permute.xlu0 %1676
      %1678 = vrot.lane.b32.xlu0 %v932, 112
      %v1679 = vpop.permute.xlu0 %1678
      %1680 = vrot.lane.b32.xlu0 %v935, 112
      %v1681 = vpop.permute.xlu0 %1680
      %1682 = vrot.lane.b32.xlu0 %v937, 112
      %v1683 = vpop.permute.xlu0 %1682
      %1684 = vrot.lane.b32.xlu0 %v940, 112
      %v1685 = vpop.permute.xlu0 %1684
      %1686 = vrot.lane.b32.xlu0 %v942, 112
      %v1687 = vpop.permute.xlu0 %1686
      %1688 = vrot.lane.b32.xlu0 %v945, 112
      %v1689 = vpop.permute.xlu0 %1688
      %1690 = vrot.lane.b32.xlu0 %v947, 112
      %v1691 = vpop.permute.xlu0 %1690
      %1692 = vrot.lane.b32.xlu0 %v1030, 112
      %v1693 = vpop.permute.xlu0 %1692
      %1694 = vrot.lane.b32.xlu0 %v1032, 112
      %v1695 = vpop.permute.xlu0 %1694
      %1696 = vrot.lane.b32.xlu0 %v872, 112
      %v1697 = vpop.permute.xlu0 %1696
      %vm1729 = vcmask 130048
      %v1730 = vsel %vm1729, 0.0, %v1070
      %v1731 = vsel %vm1729, %v807, %v1072
      %v1732 = vsel %vm1729, %v714, %v1074
      %v1733 = vsel %vm1729, %v808, %v1076
      %v1734 = vsel %vm1729, %v717, %v1078
      %v1735 = vsel %vm1729, %v809, %v1080
      %v1736 = vsel %vm1729, %v720, %v1082
      %v1737 = vsel %vm1729, %v810, %v1084
      %v1738 = vsel %vm1729, %v723, %v1086
      %v1739 = vsel %vm1729, %v811, %v1088
      %v1740 = vsel %vm1729, %v726, %v1090
      %v1741 = vsel %vm1729, %v812, %v1092
      %v1742 = vsel %vm1729, %v729, %v1094
      %v1743 = vsel %vm1729, %v813, %v1096
      %v1744 = vsel %vm1729, %v732, %v1098
      %v1745 = vsel %vm1729, %v814, %v1100
      %v1746 = vsel %vm1729, %v735, %v1102
      %v1747 = vsel %vm1729, %v815, %v1104
      %v1748 = vsel %vm1729, %v738, %v1106
      %v1749 = vsel %vm1729, %v816, %v1108
      %v1750 = vsel %vm1729, %v741, %v1110
      %v1751 = vsel %vm1729, %v817, %v1112
      %v1752 = vsel %vm1729, %v744, %v1114
      %v1753 = vsel %vm1729, %v818, %v1116
      %v1754 = vsel %vm1729, %v747, %v1118
      %v1755 = vsel %vm1729, %v819, %v1120
      %v1756 = vsel %vm1729, %v750, %v1122
      %v1757 = vsel %vm1729, %v820, %v1124
      %v1758 = vsel %vm1729, %v753, %v1126
      %v1759 = vsel %vm1729, %v821, %v1128
      %v1760 = vsel %vm1729, %v756, %v1130
      %vm1761 = vcmask 261120
      %v1762 = vsel %vm1761, %v1730, %v1163
      %v1763 = vsel %vm1761, %v1731, %v1165
      %v1764 = vsel %vm1761, %v1732, %v1167
      %v1765 = vsel %vm1761, %v1733, %v1169
      %v1766 = vsel %vm1761, %v1734, %v1171
      %v1767 = vsel %vm1761, %v1735, %v1173
      %v1768 = vsel %vm1761, %v1736, %v1175
      %v1769 = vsel %vm1761, %v1737, %v1177
      %v1770 = vsel %vm1761, %v1738, %v1179
      %v1771 = vsel %vm1761, %v1739, %v1181
      %v1772 = vsel %vm1761, %v1740, %v1183
      %v1773 = vsel %vm1761, %v1741, %v1185
      %v1774 = vsel %vm1761, %v1742, %v1187
      %v1775 = vsel %vm1761, %v1743, %v1189
      %v1776 = vsel %vm1761, %v1744, %v1191
      %v1777 = vsel %vm1761, %v1745, %v1193
      %v1778 = vsel %vm1761, %v1746, %v1195
      %v1779 = vsel %vm1761, %v1747, %v1197
      %v1780 = vsel %vm1761, %v1748, %v1199
      %v1781 = vsel %vm1761, %v1749, %v1201
      %v1782 = vsel %vm1761, %v1750, %v1203
      %v1783 = vsel %vm1761, %v1751, %v1205
      %v1784 = vsel %vm1761, %v1752, %v1207
      %v1785 = vsel %vm1761, %v1753, %v1209
      %v1786 = vsel %vm1761, %v1754, %v1211
      %v1787 = vsel %vm1761, %v1755, %v1213
      %v1788 = vsel %vm1761, %v1756, %v1215
      %v1789 = vsel %vm1761, %v1757, %v1217
      %v1790 = vsel %vm1761, %v1758, %v1219
      %v1791 = vsel %vm1761, %v1759, %v1221
      %v1792 = vsel %vm1761, %v1760, %v1223
      %vm1793 = vcmask 392192
      %v1794 = vsel %vm1793, %v1762, %v1256
      %v1795 = vsel %vm1793, %v1762, %v1258
      %v1796 = vsel %vm1793, %v1763, %v1260
      %v1797 = vsel %vm1793, %v1764, %v1262
      %v1798 = vsel %vm1793, %v1765, %v1264
      %v1799 = vsel %vm1793, %v1766, %v1266
      %v1800 = vsel %vm1793, %v1767, %v1268
      %v1801 = vsel %vm1793, %v1768, %v1270
      %v1802 = vsel %vm1793, %v1769, %v1272
      %v1803 = vsel %vm1793, %v1770, %v1274
      %v1804 = vsel %vm1793, %v1771, %v1276
      %v1805 = vsel %vm1793, %v1772, %v1278
      %v1806 = vsel %vm1793, %v1773, %v1280
      %v1807 = vsel %vm1793, %v1774, %v1282
      %v1808 = vsel %vm1793, %v1775, %v1284
      %v1809 = vsel %vm1793, %v1776, %v1286
      %v1810 = vsel %vm1793, %v1777, %v1288
      %v1811 = vsel %vm1793, %v1778, %v1290
      %v1812 = vsel %vm1793, %v1779, %v1292
      %v1813 = vsel %vm1793, %v1780, %v1294
      %v1814 = vsel %vm1793, %v1781, %v1296
      %v1815 = vsel %vm1793, %v1782, %v1298
      %v1816 = vsel %vm1793, %v1783, %v1300
      %v1817 = vsel %vm1793, %v1784, %v1302
      %v1818 = vsel %vm1793, %v1785, %v1304
      %v1819 = vsel %vm1793, %v1786, %v1306
      %v1820 = vsel %vm1793, %v1787, %v1308
      %v1821 = vsel %vm1793, %v1788, %v1310
      %v1822 = vsel %vm1793, %v1789, %v1312
      %v1823 = vsel %vm1793, %v1790, %v1314
      %v1824 = vsel %vm1793, %v1791, %v1316
      %v1825 = vsel %vm1793, %v1792, %v1318
      %vm1826 = vcmask 523264
      %v1827 = vsel %vm1826, %v1794, %v1352
      %v1828 = vsel %vm1826, %v1795, %v1354
      %v1829 = vsel %vm1826, %v1796, %v1356
      %v1830 = vsel %vm1826, %v1797, %v1358
      %v1831 = vsel %vm1826, %v1798, %v1360
      %v1832 = vsel %vm1826, %v1799, %v1362
      %v1833 = vsel %vm1826, %v1800, %v1364
      %v1834 = vsel %vm1826, %v1801, %v1366
      %v1835 = vsel %vm1826, %v1802, %v1368
      %v1836 = vsel %vm1826, %v1803, %v1370
      %v1837 = vsel %vm1826, %v1804, %v1372
      %v1838 = vsel %vm1826, %v1805, %v1374
      %v1839 = vsel %vm1826, %v1806, %v1376
      %v1840 = vsel %vm1826, %v1807, %v1378
      %v1841 = vsel %vm1826, %v1808, %v1380
      %v1842 = vsel %vm1826, %v1809, %v1382
      %v1843 = vsel %vm1826, %v1810, %v1384
      %v1844 = vsel %vm1826, %v1811, %v1386
      %v1845 = vsel %vm1826, %v1812, %v1388
      %v1846 = vsel %vm1826, %v1813, %v1390
      %v1847 = vsel %vm1826, %v1814, %v1392
      %v1848 = vsel %vm1826, %v1815, %v1394
      %v1849 = vsel %vm1826, %v1816, %v1396
      %v1850 = vsel %vm1826, %v1817, %v1398
      %v1851 = vsel %vm1826, %v1818, %v1400
      %v1852 = vsel %vm1826, %v1819, %v1402
      %v1853 = vsel %vm1826, %v1820, %v1404
      %v1854 = vsel %vm1826, %v1821, %v1406
      %v1855 = vsel %vm1826, %v1822, %v1408
      %v1856 = vsel %vm1826, %v1823, %v1410
      %v1857 = vsel %vm1826, %v1824, %v1412
      %v1858 = vsel %vm1826, %v1825, %v1414
      %vm1859 = vcmask 654336
      %v1860 = vsel %vm1859, %v1827, %v1448
      %v1861 = vsel %vm1859, %v1828, %v1450
      %v1862 = vsel %vm1859, %v1829, %v1452
      %v1863 = vsel %vm1859, %v1830, %v1454
      %v1864 = vsel %vm1859, %v1831, %v1456
      %v1865 = vsel %vm1859, %v1832, %v1458
      %v1866 = vsel %vm1859, %v1833, %v1460
      %v1867 = vsel %vm1859, %v1834, %v1462
      %v1868 = vsel %vm1859, %v1835, %v1464
      %v1869 = vsel %vm1859, %v1836, %v1466
      %v1870 = vsel %vm1859, %v1837, %v1468
      %v1871 = vsel %vm1859, %v1838, %v1470
      %v1872 = vsel %vm1859, %v1839, %v1472
      %v1873 = vsel %vm1859, %v1840, %v1474
      %v1874 = vsel %vm1859, %v1841, %v1476
      %v1875 = vsel %vm1859, %v1842, %v1478
      %v1876 = vsel %vm1859, %v1843, %v1480
      %v1877 = vsel %vm1859, %v1844, %v1482
      %v1878 = vsel %vm1859, %v1845, %v1484
      %v1879 = vsel %vm1859, %v1846, %v1486
      %v1880 = vsel %vm1859, %v1847, %v1488
      %v1881 = vsel %vm1859, %v1848, %v1490
      %v1882 = vsel %vm1859, %v1849, %v1492
      %v1883 = vsel %vm1859, %v1850, %v1494
      %v1884 = vsel %vm1859, %v1851, %v1496
      %v1885 = vsel %vm1859, %v1852, %v1498
      %v1886 = vsel %vm1859, %v1853, %v1500
      %v1887 = vsel %vm1859, %v1854, %v1502
      %v1888 = vsel %vm1859, %v1855, %v1504
      %v1889 = vsel %vm1859, %v1856, %v1506
      %v1890 = vsel %vm1859, %v1857, %v1508
      %v1891 = vsel %vm1859, %v1858, %v1510
      %vm1892 = vcmask 785408
      %v1893 = vsel %vm1892, %v1860, %v1544
      %v1894 = vsel %vm1892, %v1861, %v1546
      %v1895 = vsel %vm1892, %v1862, %v1548
      %v1896 = vsel %vm1892, %v1863, %v1550
      %v1897 = vsel %vm1892, %v1864, %v1552
      %v1898 = vsel %vm1892, %v1865, %v1554
      %v1899 = vsel %vm1892, %v1866, %v1556
      %v1900 = vsel %vm1892, %v1867, %v1558
      %v1901 = vsel %vm1892, %v1868, %v1560
      %v1902 = vsel %vm1892, %v1869, %v1562
      %v1903 = vsel %vm1892, %v1870, %v1564
      %v1904 = vsel %vm1892, %v1871, %v1566
      %v1905 = vsel %vm1892, %v1872, %v1568
      %v1906 = vsel %vm1892, %v1873, %v1570
      %v1907 = vsel %vm1892, %v1874, %v1572
      %v1908 = vsel %vm1892, %v1875, %v1574
      %v1909 = vsel %vm1892, %v1876, %v1576
      %v1910 = vsel %vm1892, %v1877, %v1578
      %v1911 = vsel %vm1892, %v1878, %v1580
      %v1912 = vsel %vm1892, %v1879, %v1582
      %v1913 = vsel %vm1892, %v1880, %v1584
      %v1914 = vsel %vm1892, %v1881, %v1586
      %v1915 = vsel %vm1892, %v1882, %v1588
      %v1916 = vsel %vm1892, %v1883, %v1590
      %v1917 = vsel %vm1892, %v1884, %v1592
      %v1918 = vsel %vm1892, %v1885, %v1594
      %v1919 = vsel %vm1892, %v1886, %v1596
      %v1920 = vsel %vm1892, %v1887, %v1598
      %v1921 = vsel %vm1892, %v1888, %v1600
      %v1922 = vsel %vm1892, %v1889, %v1602
      %v1923 = vsel %vm1892, %v1890, %v1604
      %v1924 = vsel %vm1892, %v1891, %v1604
      %vm1925 = vcmask 916480
      %v1926 = vsel %vm1925, %v1893, %v1637
      %v1927 = vsel %vm1925, %v1894, %v1639
      %v1928 = vsel %vm1925, %v1895, %v1641
      %v1929 = vsel %vm1925, %v1896, %v1643
      %v1930 = vsel %vm1925, %v1897, %v1645
      %v1931 = vsel %vm1925, %v1898, %v1647
      %v1932 = vsel %vm1925, %v1899, %v1649
      %v1933 = vsel %vm1925, %v1900, %v1651
      %v1934 = vsel %vm1925, %v1901, %v1653
      %v1935 = vsel %vm1925, %v1902, %v1655
      %v1936 = vsel %vm1925, %v1903, %v1657
      %v1937 = vsel %vm1925, %v1904, %v1659
      %v1938 = vsel %vm1925, %v1905, %v1661
      %v1939 = vsel %vm1925, %v1906, %v1663
      %v1940 = vsel %vm1925, %v1907, %v1665
      %v1941 = vsel %vm1925, %v1908, %v1667
      %v1942 = vsel %vm1925, %v1909, %v1669
      %v1943 = vsel %vm1925, %v1910, %v1671
      %v1944 = vsel %vm1925, %v1911, %v1673
      %v1945 = vsel %vm1925, %v1912, %v1675
      %v1946 = vsel %vm1925, %v1913, %v1677
      %v1947 = vsel %vm1925, %v1914, %v1679
      %v1948 = vsel %vm1925, %v1915, %v1681
      %v1949 = vsel %vm1925, %v1916, %v1683
      %v1950 = vsel %vm1925, %v1917, %v1685
      %v1951 = vsel %vm1925, %v1918, %v1687
      %v1952 = vsel %vm1925, %v1919, %v1689
      %v1953 = vsel %vm1925, %v1920, %v1691
      %v1954 = vsel %vm1925, %v1921, %v1693
      %v1955 = vsel %vm1925, %v1922, %v1695
      %v1956 = vsel %vm1925, %v1923, %v1697
      %v1957 = vsel %vm1925, %v1924, %v1697
      %v1958 = vpack.c.bf16 %v1927, %v1926
      %v1959 = vpack.c.bf16 %v960, %v958
      %v1960 = vpack.c.bf16 %v1929, %v1928
      %v1961 = vpack.c.bf16 %v965, %v963
      %v1962 = vpack.c.bf16 %v1931, %v1930
      %v1963 = vpack.c.bf16 %v970, %v968
      %v1964 = vpack.c.bf16 %v1933, %v1932
      %v1965 = vpack.c.bf16 %v975, %v973
      %v1966 = vpack.c.bf16 %v1935, %v1934
      %v1967 = vpack.c.bf16 %v980, %v978
      %v1968 = vpack.c.bf16 %v1937, %v1936
      %v1969 = vpack.c.bf16 %v985, %v983
      %v1970 = vpack.c.bf16 %v1939, %v1938
      %v1971 = vpack.c.bf16 %v990, %v988
      %v1972 = vpack.c.bf16 %v1941, %v1940
      %v1973 = vpack.c.bf16 %v995, %v993
      %v1974 = vpack.c.bf16 %v1943, %v1942
      %v1975 = vpack.c.bf16 %v1000, %v998
      %v1976 = vpack.c.bf16 %v1945, %v1944
      %v1977 = vpack.c.bf16 %v1005, %v1003
      %v1978 = vpack.c.bf16 %v1947, %v1946
      %v1979 = vpack.c.bf16 %v1010, %v1008
      %v1980 = vpack.c.bf16 %v1949, %v1948
      %v1981 = vpack.c.bf16 %v1015, %v1013
      %v1982 = vpack.c.bf16 %v1951, %v1950
      %v1983 = vpack.c.bf16 %v1020, %v1018
      %v1984 = vpack.c.bf16 %v1953, %v1952
      %v1985 = vpack.c.bf16 %v1025, %v1023
      %v1986 = vpack.c.bf16 %v1955, %v1954
      %v1987 = vpack.c.bf16 %v1037, %v1035
      %v1988 = vpack.c.bf16 %v1957, %v1956
      %v1989 = vpack.c.bf16 %v950, %v950
      %v1990 = vld [vmem:[%s6] sm:$0xf]
      %v1991 = vld [vmem:[%s6 + $0x4] sm:$0xf]
      %v1992 = vld [vmem:[%s6 + $0x8] sm:$0xf]
      %v1993 = vld [vmem:[%s6 + $0xc] sm:$0xf]
      %v1994 = vld [vmem:[%s6 + $0x10] sm:$0xf]
      %v1995 = vld [vmem:[%s6 + $0x14] sm:$0xf]
      %v1996 = vld [vmem:[%s6 + $0x18] sm:$0xf]
      %v1997 = vld [vmem:[%s6 + $0x1c] sm:$0xf]
      %v1998 = vld [vmem:[%s6 + $0x20] sm:$0xf]
      %v1999 = vld [vmem:[%s6 + $0x24] sm:$0xf]
      %v2000 = vld [vmem:[%s6 + $0x28] sm:$0xf]
      %v2001 = vld [vmem:[%s6 + $0x2c] sm:$0xf]
      %v2002 = vld [vmem:[%s6 + $0x30] sm:$0xf]
      %v2003 = vld [vmem:[%s6 + $0x34] sm:$0xf]
      %v2004 = vld [vmem:[%s6 + $0x38] sm:$0xf]
      %v2005 = vld [vmem:[%s6 + $0x3c] sm:$0xf]
      %v2006 = vld [vmem:[%s6 + $0x40] sm:$0xf]
      %v2007 = vld [vmem:[%s6 + $0x44] sm:$0xf]
      %v2026 = vunpack.c.l.b16 %v1990
      %v2027 = vunpack.c.l.b16 %v1991
      %v2028 = vunpack.c.l.b16 %v1992
      %v2029 = vunpack.c.l.b16 %v1993
      %v2030 = vunpack.c.l.b16 %v1994
      %v2031 = vunpack.c.l.b16 %v1995
      %v2032 = vunpack.c.l.b16 %v1996
      %v2033 = vunpack.c.l.b16 %v1997
      %v2034 = vunpack.c.l.b16 %v1998
      %v2035 = vunpack.c.l.b16 %v1999
      %v2036 = vunpack.c.l.b16 %v2000
      %v2037 = vunpack.c.l.b16 %v2001
      %v2038 = vunpack.c.l.b16 %v2002
      %v2039 = vunpack.c.l.b16 %v2003
      %v2040 = vunpack.c.l.b16 %v2004
      %v2041 = vunpack.c.l.b16 %v2005
      %v2042 = vunpack.c.l.b16 %v2006
      %v2043 = vunpack.c.l.b16 %v2007
      %v2044 = vpack.c.b16 %v2027, %v2026
      %v2045 = vpack.c.b16 %v2029, %v2028
      %v2046 = vpack.c.b16 %v2031, %v2030
      %v2047 = vpack.c.b16 %v2033, %v2032
      %v2048 = vpack.c.b16 %v2035, %v2034
      %v2049 = vpack.c.b16 %v2037, %v2036
      %v2050 = vpack.c.b16 %v2039, %v2038
      %v2051 = vpack.c.b16 %v2041, %v2040
      %v2052 = vpack.c.b16 %v2043, %v2042
      %v2063 = vsel %vm1729, %v1959, 0
      %v2066 = vsel %vm1729, %v1961, 0
      %v2069 = vsel %vm1729, %v1963, 0
      %v2072 = vsel %vm1729, %v1965, 0
      %v2075 = vsel %vm1729, %v1967, 0
      %v2078 = vsel %vm1729, %v1969, 0
      %v2081 = vsel %vm1729, %v1971, 0
      %v2084 = vsel %vm1729, %v1973, 0
      %v2087 = vsel %vm1729, %v1975, 0
      %v2090 = vsel %vm1729, %v1977, 0
      %v2093 = vsel %vm1729, %v1979, 0
      %v2096 = vsel %vm1729, %v1981, 0
      %v2099 = vsel %vm1729, %v1983, 0
      %v2102 = vsel %vm1729, %v1985, 0
      %v2105 = vsel %vm1729, %v1987, 0
      %v2108 = vsel %vm1729, %v1989, 0
      %2110 = vmatpush.bf16.msra.mxu0 %v2051
      %2111 = vmatpush.bf16.msra.mxu0 %v2050
      %2112 = vmatpush.bf16.msra.mxu0 %v2049
      %2113 = vmatpush.bf16.msra.mxu0 %v2048
      %2114 = vmatpush.bf16.msra.mxu0 %v2047
      %2115 = vmatpush.bf16.msra.mxu0 %v2046
      %2116 = vmatpush.bf16.msra.mxu0 %v2045
      %2117 = vmatpush.bf16.msra.mxu0 %v2044
      %2118 = vmatmul.bf16.gmra.mxu0 %v1958
      %v2119 = vpop.f32.mrf.mxu0
      %v2120 = vadd.f32 0.0, %v2119
      %v2121 = vpop.f32.mrf.mxu0
      %v2122 = vadd.f32 0.0, %v2121
      %2123 = vmatmul.bf16.gmra.mxu0 %v1960
      %v2124 = vpop.f32.mrf.mxu0
      %v2125 = vadd.f32 0.0, %v2124
      %v2126 = vpop.f32.mrf.mxu0
      %v2127 = vadd.f32 0.0, %v2126
      %2128 = vmatmul.bf16.gmra.mxu0 %v1962
      %v2129 = vpop.f32.mrf.mxu0
      %v2130 = vadd.f32 0.0, %v2129
      %v2131 = vpop.f32.mrf.mxu0
      %v2132 = vadd.f32 0.0, %v2131
      %2133 = vmatmul.bf16.gmra.mxu0 %v1964
      %v2134 = vpop.f32.mrf.mxu0
      %v2135 = vadd.f32 0.0, %v2134
      %v2136 = vpop.f32.mrf.mxu0
      %v2137 = vadd.f32 0.0, %v2136
      %2138 = vmatmul.bf16.gmra.mxu0 %v1966
      %v2139 = vpop.f32.mrf.mxu0
      %v2140 = vadd.f32 0.0, %v2139
      %v2141 = vpop.f32.mrf.mxu0
      %v2142 = vadd.f32 0.0, %v2141
      %2143 = vmatmul.bf16.gmra.mxu0 %v1968
      %v2144 = vpop.f32.mrf.mxu0
      %v2145 = vadd.f32 0.0, %v2144
      %v2146 = vpop.f32.mrf.mxu0
      %v2147 = vadd.f32 0.0, %v2146
      %2148 = vmatmul.bf16.gmra.mxu0 %v1970
      %v2149 = vpop.f32.mrf.mxu0
      %v2150 = vadd.f32 0.0, %v2149
      %v2151 = vpop.f32.mrf.mxu0
      %v2152 = vadd.f32 0.0, %v2151
      %2153 = vmatmul.bf16.gmra.mxu0 %v1972
      %v2154 = vpop.f32.mrf.mxu0
      %v2155 = vadd.f32 0.0, %v2154
      %v2156 = vpop.f32.mrf.mxu0
      %v2157 = vadd.f32 0.0, %v2156
      %2158 = vmatmul.bf16.gmra.mxu0 %v1974
      %v2159 = vpop.f32.mrf.mxu0
      %v2160 = vadd.f32 0.0, %v2159
      %v2161 = vpop.f32.mrf.mxu0
      %v2162 = vadd.f32 0.0, %v2161
      %2163 = vmatmul.bf16.gmra.mxu0 %v1976
      %v2164 = vpop.f32.mrf.mxu0
      %v2165 = vadd.f32 0.0, %v2164
      %v2166 = vpop.f32.mrf.mxu0
      %v2167 = vadd.f32 0.0, %v2166
      %2168 = vmatmul.bf16.gmra.mxu0 %v1978
      %v2169 = vpop.f32.mrf.mxu0
      %v2170 = vadd.f32 0.0, %v2169
      %v2171 = vpop.f32.mrf.mxu0
      %v2172 = vadd.f32 0.0, %v2171
      %2173 = vmatmul.bf16.gmra.mxu0 %v1980
      %v2174 = vpop.f32.mrf.mxu0
      %v2175 = vadd.f32 0.0, %v2174
      %v2176 = vpop.f32.mrf.mxu0
      %v2177 = vadd.f32 0.0, %v2176
      %2178 = vmatmul.bf16.gmra.mxu0 %v1982
      %v2179 = vpop.f32.mrf.mxu0
      %v2180 = vadd.f32 0.0, %v2179
      %v2181 = vpop.f32.mrf.mxu0
      %v2182 = vadd.f32 0.0, %v2181
      %2183 = vmatmul.bf16.gmra.mxu0 %v1984
      %v2184 = vpop.f32.mrf.mxu0
      %v2185 = vadd.f32 0.0, %v2184
      %v2186 = vpop.f32.mrf.mxu0
      %v2187 = vadd.f32 0.0, %v2186
      %2188 = vmatmul.bf16.gmra.mxu0 %v1986
      %v2189 = vpop.f32.mrf.mxu0
      %v2190 = vadd.f32 0.0, %v2189
      %v2191 = vpop.f32.mrf.mxu0
      %v2192 = vadd.f32 0.0, %v2191
      %2193 = vmatmul.bf16.gmra.mxu0 %v1988
      %v2194 = vpop.f32.mrf.mxu0
      %v2195 = vadd.f32 0.0, %v2194
      %v2196 = vpop.f32.mrf.mxu0
      %v2197 = vadd.f32 0.0, %v2196
      %2198 = vdwg.mxu0
      %2199 = vmatpush.bf16.msra.mxu0 0
      %2200 = vmatpush.bf16.msra.mxu0 0
      %2201 = vmatpush.bf16.msra.mxu0 0
      %2202 = vmatpush.bf16.msra.mxu0 0
      %2203 = vmatpush.bf16.msra.mxu0 0
      %2204 = vmatpush.bf16.msra.mxu0 0
      %2205 = vmatpush.bf16.msra.mxu0 0
      %2206 = vmatpush.bf16.msra.mxu0 %v2052
      %2207 = vmatmul.bf16.gmra.mxu0 %v2063
      %v2208 = vpop.f32.mrf.mxu0
      %v2209 = vadd.f32 %v2120, %v2208
      %v2210 = vpop.f32.mrf.mxu0
      %v2211 = vadd.f32 %v2122, %v2210
      %2212 = vmatmul.bf16.gmra.mxu0 %v2066
      %v2213 = vpop.f32.mrf.mxu0
      %v2214 = vadd.f32 %v2125, %v2213
      %v2215 = vpop.f32.mrf.mxu0
      %v2216 = vadd.f32 %v2127, %v2215
      %2217 = vmatmul.bf16.gmra.mxu0 %v2069
      %v2218 = vpop.f32.mrf.mxu0
      %v2219 = vadd.f32 %v2130, %v2218
      %v2220 = vpop.f32.mrf.mxu0
      %v2221 = vadd.f32 %v2132, %v2220
      %2222 = vmatmul.bf16.gmra.mxu0 %v2072
      %v2223 = vpop.f32.mrf.mxu0
      %v2224 = vadd.f32 %v2135, %v2223
      %v2225 = vpop.f32.mrf.mxu0
      %v2226 = vadd.f32 %v2137, %v2225
      %2227 = vmatmul.bf16.gmra.mxu0 %v2075
      %v2228 = vpop.f32.mrf.mxu0
      %v2229 = vadd.f32 %v2140, %v2228
      %v2230 = vpop.f32.mrf.mxu0
      %v2231 = vadd.f32 %v2142, %v2230
      %2232 = vmatmul.bf16.gmra.mxu0 %v2078
      %v2233 = vpop.f32.mrf.mxu0
      %v2234 = vadd.f32 %v2145, %v2233
      %v2235 = vpop.f32.mrf.mxu0
      %v2236 = vadd.f32 %v2147, %v2235
      %2237 = vmatmul.bf16.gmra.mxu0 %v2081
      %v2238 = vpop.f32.mrf.mxu0
      %v2239 = vadd.f32 %v2150, %v2238
      %v2240 = vpop.f32.mrf.mxu0
      %v2241 = vadd.f32 %v2152, %v2240
      %2242 = vmatmul.bf16.gmra.mxu0 %v2084
      %v2243 = vpop.f32.mrf.mxu0
      %v2244 = vadd.f32 %v2155, %v2243
      %v2245 = vpop.f32.mrf.mxu0
      %v2246 = vadd.f32 %v2157, %v2245
      %2247 = vmatmul.bf16.gmra.mxu0 %v2087
      %v2248 = vpop.f32.mrf.mxu0
      %v2249 = vadd.f32 %v2160, %v2248
      %v2250 = vpop.f32.mrf.mxu0
      %v2251 = vadd.f32 %v2162, %v2250
      %2252 = vmatmul.bf16.gmra.mxu0 %v2090
      %v2253 = vpop.f32.mrf.mxu0
      %v2254 = vadd.f32 %v2165, %v2253
      %v2255 = vpop.f32.mrf.mxu0
      %v2256 = vadd.f32 %v2167, %v2255
      %2257 = vmatmul.bf16.gmra.mxu0 %v2093
      %v2258 = vpop.f32.mrf.mxu0
      %v2259 = vadd.f32 %v2170, %v2258
      %v2260 = vpop.f32.mrf.mxu0
      %v2261 = vadd.f32 %v2172, %v2260
      %2262 = vmatmul.bf16.gmra.mxu0 %v2096
      %v2263 = vpop.f32.mrf.mxu0
      %v2264 = vadd.f32 %v2175, %v2263
      %v2265 = vpop.f32.mrf.mxu0
      %v2266 = vadd.f32 %v2177, %v2265
      %2267 = vmatmul.bf16.gmra.mxu0 %v2099
      %v2268 = vpop.f32.mrf.mxu0
      %v2269 = vadd.f32 %v2180, %v2268
      %v2270 = vpop.f32.mrf.mxu0
      %v2271 = vadd.f32 %v2182, %v2270
      %2272 = vmatmul.bf16.gmra.mxu0 %v2102
      %v2273 = vpop.f32.mrf.mxu0
      %v2274 = vadd.f32 %v2185, %v2273
      %v2275 = vpop.f32.mrf.mxu0
      %v2276 = vadd.f32 %v2187, %v2275
      %2277 = vmatmul.bf16.gmra.mxu0 %v2105
      %v2278 = vpop.f32.mrf.mxu0
      %v2279 = vadd.f32 %v2190, %v2278
      %v2280 = vpop.f32.mrf.mxu0
      %v2281 = vadd.f32 %v2192, %v2280
      %2282 = vmatmul.bf16.gmra.mxu0 %v2108
      %v2283 = vpop.f32.mrf.mxu0
      %v2284 = vadd.f32 %v2195, %v2283
      %v2285 = vpop.f32.mrf.mxu0
      %v2286 = vadd.f32 %v2197, %v2285
      %2287 = vdwg.mxu0
      %2320 = vrot.lane.b32.xlu0 %v2209, 4
      %v2321 = vpop.permute.xlu0 %2320
      %2322 = vrot.lane.b32.xlu0 %v2211, 4
      %v2323 = vpop.permute.xlu0 %2322
      %2324 = vrot.lane.b32.xlu0 %v2214, 4
      %v2325 = vpop.permute.xlu0 %2324
      %2326 = vrot.lane.b32.xlu0 %v2216, 4
      %v2327 = vpop.permute.xlu0 %2326
      %2328 = vrot.lane.b32.xlu0 %v2219, 4
      %v2329 = vpop.permute.xlu0 %2328
      %2330 = vrot.lane.b32.xlu0 %v2221, 4
      %v2331 = vpop.permute.xlu0 %2330
      %2332 = vrot.lane.b32.xlu0 %v2224, 4
      %v2333 = vpop.permute.xlu0 %2332
      %2334 = vrot.lane.b32.xlu0 %v2226, 4
      %v2335 = vpop.permute.xlu0 %2334
      %2336 = vrot.lane.b32.xlu0 %v2229, 4
      %v2337 = vpop.permute.xlu0 %2336
      %2338 = vrot.lane.b32.xlu0 %v2231, 4
      %v2339 = vpop.permute.xlu0 %2338
      %2340 = vrot.lane.b32.xlu0 %v2234, 4
      %v2341 = vpop.permute.xlu0 %2340
      %2342 = vrot.lane.b32.xlu0 %v2236, 4
      %v2343 = vpop.permute.xlu0 %2342
      %2344 = vrot.lane.b32.xlu0 %v2239, 4
      %v2345 = vpop.permute.xlu0 %2344
      %2346 = vrot.lane.b32.xlu0 %v2241, 4
      %v2347 = vpop.permute.xlu0 %2346
      %2348 = vrot.lane.b32.xlu0 %v2244, 4
      %v2349 = vpop.permute.xlu0 %2348
      %2350 = vrot.lane.b32.xlu0 %v2246, 4
      %v2351 = vpop.permute.xlu0 %2350
      %2352 = vrot.lane.b32.xlu0 %v2249, 4
      %v2353 = vpop.permute.xlu0 %2352
      %2354 = vrot.lane.b32.xlu0 %v2251, 4
      %v2355 = vpop.permute.xlu0 %2354
      %2356 = vrot.lane.b32.xlu0 %v2254, 4
      %v2357 = vpop.permute.xlu0 %2356
      %2358 = vrot.lane.b32.xlu0 %v2256, 4
      %v2359 = vpop.permute.xlu0 %2358
      %2360 = vrot.lane.b32.xlu0 %v2259, 4
      %v2361 = vpop.permute.xlu0 %2360
      %2362 = vrot.lane.b32.xlu0 %v2261, 4
      %v2363 = vpop.permute.xlu0 %2362
      %2364 = vrot.lane.b32.xlu0 %v2264, 4
      %v2365 = vpop.permute.xlu0 %2364
      %2366 = vrot.lane.b32.xlu0 %v2266, 4
      %v2367 = vpop.permute.xlu0 %2366
      %2368 = vrot.lane.b32.xlu0 %v2269, 4
      %v2369 = vpop.permute.xlu0 %2368
      %2370 = vrot.lane.b32.xlu0 %v2271, 4
      %v2371 = vpop.permute.xlu0 %2370
      %2372 = vrot.lane.b32.xlu0 %v2274, 4
      %v2373 = vpop.permute.xlu0 %2372
      %2374 = vrot.lane.b32.xlu0 %v2276, 4
      %v2375 = vpop.permute.xlu0 %2374
      %2376 = vrot.lane.b32.xlu0 %v2279, 4
      %v2377 = vpop.permute.xlu0 %2376
      %2378 = vrot.lane.b32.xlu0 %v2281, 4
      %v2379 = vpop.permute.xlu0 %2378
      %2380 = vrot.lane.b32.xlu0 %v2284, 4
      %v2381 = vpop.permute.xlu0 %2380
      %2382 = vrot.lane.b32.xlu0 %v2286, 4
      %v2383 = vpop.permute.xlu0 %2382
      %v2416 = vsel %vm433, %v280, %v2321
      %v2417 = vsel %vm433, %v281, %v2323
      %v2418 = vsel %vm433, %v282, %v2325
      %v2419 = vsel %vm433, %v283, %v2327
      %v2420 = vsel %vm433, %v284, %v2329
      %v2421 = vsel %vm433, %v285, %v2331
      %v2422 = vsel %vm433, %v286, %v2333
      %v2423 = vsel %vm433, %v287, %v2335
      %v2424 = vsel %vm433, %v288, %v2337
      %v2425 = vsel %vm433, %v289, %v2339
      %v2426 = vsel %vm433, %v290, %v2341
      %v2427 = vsel %vm433, %v291, %v2343
      %v2428 = vsel %vm433, %v292, %v2345
      %v2429 = vsel %vm433, %v293, %v2347
      %v2430 = vsel %vm433, %v294, %v2349
      %v2431 = vsel %vm433, %v295, %v2351
      %v2432 = vsel %vm433, %v296, %v2353
      %v2433 = vsel %vm433, %v297, %v2355
      %v2434 = vsel %vm433, %v298, %v2357
      %v2435 = vsel %vm433, %v299, %v2359
      %v2436 = vsel %vm433, %v300, %v2361
      %v2437 = vsel %vm433, %v301, %v2363
      %v2438 = vsel %vm433, %v302, %v2365
      %v2439 = vsel %vm433, %v303, %v2367
      %v2440 = vsel %vm433, %v304, %v2369
      %v2441 = vsel %vm433, %v305, %v2371
      %v2442 = vsel %vm433, %v306, %v2373
      %v2443 = vsel %vm433, %v307, %v2375
      %v2444 = vsel %vm433, %v308, %v2377
      %v2445 = vsel %vm433, %v309, %v2379
      %v2446 = vsel %vm433, %v310, %v2381
      %v2447 = vsel %vm433, %v311, %v2383
      %vm2448 = vcmask 64512
      %2449 = vst.msk [vmem:[%s278] sm:$0xff] %vm2448, %v2416
      %2450 = vst.msk [vmem:[%s278 + $0x8] sm:$0xff] %vm2448, %v2417
      %2451 = vst.msk [vmem:[%s278 + $0x10] sm:$0xff] %vm2448, %v2418
      %2452 = vst.msk [vmem:[%s278 + $0x18] sm:$0xff] %vm2448, %v2419
      %2453 = vst.msk [vmem:[%s278 + $0x20] sm:$0xff] %vm2448, %v2420
      %2454 = vst.msk [vmem:[%s278 + $0x28] sm:$0xff] %vm2448, %v2421
      %2455 = vst.msk [vmem:[%s278 + $0x30] sm:$0xff] %vm2448, %v2422
      %2456 = vst.msk [vmem:[%s278 + $0x38] sm:$0xff] %vm2448, %v2423
      %2457 = vst.msk [vmem:[%s278 + $0x40] sm:$0xff] %vm2448, %v2424
      %2458 = vst.msk [vmem:[%s278 + $0x48] sm:$0xff] %vm2448, %v2425
      %2459 = vst.msk [vmem:[%s278 + $0x50] sm:$0xff] %vm2448, %v2426
      %2460 = vst.msk [vmem:[%s278 + $0x58] sm:$0xff] %vm2448, %v2427
      %2461 = vst.msk [vmem:[%s278 + $0x60] sm:$0xff] %vm2448, %v2428
      %2462 = vst.msk [vmem:[%s278 + $0x68] sm:$0xff] %vm2448, %v2429
      %2463 = vst.msk [vmem:[%s278 + $0x70] sm:$0xff] %vm2448, %v2430
      %2464 = vst.msk [vmem:[%s278 + $0x78] sm:$0xff] %vm2448, %v2431
      %2465 = vst.msk [vmem:[%s278 + $0x80] sm:$0xff] %vm2448, %v2432
      %2466 = vst.msk [vmem:[%s278 + $0x88] sm:$0xff] %vm2448, %v2433
      %2467 = vst.msk [vmem:[%s278 + $0x90] sm:$0xff] %vm2448, %v2434
      %2468 = vst.msk [vmem:[%s278 + $0x98] sm:$0xff] %vm2448, %v2435
      %2469 = vst.msk [vmem:[%s278 + $0xa0] sm:$0xff] %vm2448, %v2436
      %2470 = vst.msk [vmem:[%s278 + $0xa8] sm:$0xff] %vm2448, %v2437
      %2471 = vst.msk [vmem:[%s278 + $0xb0] sm:$0xff] %vm2448, %v2438
      %2472 = vst.msk [vmem:[%s278 + $0xb8] sm:$0xff] %vm2448, %v2439
      %2473 = vst.msk [vmem:[%s278 + $0xc0] sm:$0xff] %vm2448, %v2440
      %2474 = vst.msk [vmem:[%s278 + $0xc8] sm:$0xff] %vm2448, %v2441
      %2475 = vst.msk [vmem:[%s278 + $0xd0] sm:$0xff] %vm2448, %v2442
      %2476 = vst.msk [vmem:[%s278 + $0xd8] sm:$0xff] %vm2448, %v2443
      %2477 = vst.msk [vmem:[%s278 + $0xe0] sm:$0xff] %vm2448, %v2444
      %2478 = vst.msk [vmem:[%s278 + $0xe8] sm:$0xff] %vm2448, %v2445
      %2479 = vst.msk [vmem:[%s278 + $0xf0] sm:$0xff] %vm2448, %v2446
      %2480 = vst.msk [vmem:[%s278 + $0xf8] sm:$0xff] %vm2448, %v2447
      %p2481 = scmp.lt.s32.totalorder %s18, 1
      %s2482 = scalar_select %p2481, %s18, 1
      %s2483 = smul.addr %s2482, 32
      %s2484 = smul.addr %s2483, 8
      %s2485 = scalar_lea.vmem %s7, %s2484
      // Predicated region
      $region49: #{tpu_custom_call.1} parent=47 // pred_check
        %p2486 = pneg %p188
      $region50: #{tpu_custom_call.1} parent=47 // pred_check_branch
        %2488 = sbr.rel (%p2486) target = $region52
      $region51: #{tpu_custom_call.1} parent=47 // pred_region
        _
      $region52: #{tpu_custom_call.1} parent=47 // pred_fallthru
        _
    $region48: #{tpu_custom_call.1} parent=5 // pred_fallthru
      _
    %p2489 = scmp.le.s32.totalorder 2, %s13
    // Predicated region
    $region53: #{tpu_custom_call.1} parent=5 // pred_check
      %p2490 = pneg %p2489
    $region54: #{tpu_custom_call.1} parent=5 // pred_check_branch
      %2492 = sbr.rel (%p2490) target = $region56
    $region55: #{tpu_custom_call.1} parent=5 // pred_region
      %s2493 = ssub.s32 %s13, 2
      // Predicated region
      $region57: #{tpu_custom_call.1} parent=55 // pred_check
        %p2494 = pneg %p194
      $region58: #{tpu_custom_call.1} parent=55 // pred_check_branch
        %2496 = sbr.rel (%p2494) target = $region60
      $region59: #{tpu_custom_call.1} parent=55 // pred_region
        %p2497 = scmp.lt.s32.totalorder %s19, 1
        %s2498 = scalar_select %p2497, %s19, 1
        %s2499 = smul.addr %s2498, 32
        %s2500 = smul.addr %s2499, 8
        %s2501 = scalar_lea.vmem %s7, %s2500
      $region60: #{tpu_custom_call.1} parent=55 // pred_fallthru
        _
    $region56: #{tpu_custom_call.1} parent=5 // pred_fallthru
      _
  $region6: #{tpu_custom_call.1} parent=0 // loop_footer
    %s17 = sadd.s32 1, %s13
  $region7: #{tpu_custom_call.1} parent=0 // loop_footer_branch
    %12 = sbr.rel target = $region3
  $region8: #{tpu_custom_call.1} parent=0 // loop_exit
    _

</llo_original>
